<compile_context>
chip_gen: v5e
topology: v5e:2x2
jax: 0.10.0
libtpu: 0.0.40
codegen_flags: <defaults>
</compile_context>

<pallas_src>
import functools

import jax
import jax.numpy as jnp
from jax import lax
from jax.experimental import pallas as pl
from jax.experimental.pallas import tpu as pltpu


# ----------------------------- fused Pallas kernel ---------------------------


def _encoder_kernel(mask_ref, x_ref, wqkv_ref, bqkv_ref, wo_ref, bo_ref,
                    wf1_ref, bf1_ref, wf2_ref, bf2_ref, scales_ref,
                    o_ref, ctx_scr, *, B, T, E, H, L, eps):
    Dh = E // H
    BT = B * T

    def mm(a, w):
        # plain a @ w, weights already (in, out); f32 accumulation on the MXU.
        return jnp.dot(a, w, preferred_element_type=jnp.float32)

    def scalenorm(v, g):
        # x * g / max(||x||, eps)  ==  x * g * rsqrt(max(||x||^2, eps^2))
        ss = jnp.sum(v * v, axis=-1, keepdims=True)
        return v * (g * lax.rsqrt(jnp.maximum(ss, jnp.float32(eps * eps))))

    x = x_ref[...]                                            # (BT, E)  f32

    # Hoisted once (reused across all layers/heads): additive key-padding bias
    # fully broadcast to (B, Tq, Tk) so per-use adds are plain elementwise.
    mask_bias = jnp.broadcast_to(
        (mask_ref[...] * jnp.float32(-1e9))[:, None, :], (B, T, T))

    for l in range(L):                                        # static, L=2
        # ---------------- self attention (post-act residual) ----------------
        residual = x
        # packed QKV projection; Q columns already carry 1/sqrt(Dh).
        qkv = mm(x, wqkv_ref[l]) + bqkv_ref[l]                # (BT, 3E)
        qkv3 = qkv.reshape(B, T, 3 * E)

        for h in range(H):                                    # static, H=4
            q = qkv3[:, :, h * Dh:(h + 1) * Dh]                       # (B,T,Dh)
            k = qkv3[:, :, E + h * Dh:E + (h + 1) * Dh]               # (B,T,Dh)
            v = qkv3[:, :, 2 * E + h * Dh:2 * E + (h + 1) * Dh]       # (B,T,Dh)

            s = jnp.einsum("bqd,bkd->bqk", q, k,
                           preferred_element_type=jnp.float32)        # (B,T,T)
            s = s + mask_bias
            s_max = jnp.max(s, axis=-1, keepdims=True)
            p = jnp.exp(s - s_max)
            denom = jnp.sum(p, axis=-1, keepdims=True)
            attn = p * pl.reciprocal(denom, approx=True)               # EUP
            ctx = jnp.einsum("bqk,bkd->bqd", attn, v,
                             preferred_element_type=jnp.float32)       # (B,T,Dh)
            # stash this head's context in its lane slot of the VMEM slab
            ctx_scr[:, h * Dh:(h + 1) * Dh] = ctx.reshape(BT, Dh)

        # one full output projection instead of 4 per-head matmuls + adds
        att_out = mm(ctx_scr[...], wo_ref[l]) + bo_ref[l]              # (BT,E)
        x = scalenorm(residual + att_out, scales_ref[l, 0])

        # ---------------- feed forward (post-act residual) -------------------
        residual = x
        h1 = jnp.maximum(mm(x, wf1_ref[l]) + bf1_ref[l], 0.0)          # (BT,FF)
        y = mm(h1, wf2_ref[l]) + bf2_ref[l]                            # (BT,E)
        x = scalenorm(residual + y, scales_ref[l, 1])

    o_ref[...] = x.astype(o_ref.dtype)


# ----------------------------- param packing (off hot path) ------------------


def pack_params(params, num_heads):
    """Stack + transpose all layer weights once; fold 1/sqrt(Dh) into Q."""
    layers = params["layers"]
    E = layers[0]["att_w"].shape[1]
    Dh = E // num_heads
    scale = jnp.float32(Dh ** -0.5)

    w_qkv, b_qkv, w_o, b_o = [], [], [], []
    w_f1, b_f1, w_f2, b_f2, scales = [], [], [], [], []
    for lyr in layers:
        W = lyr["att_w"]                       # (4E, E) PyTorch (out, in)
        b = lyr["att_b"]                       # (4E,)
        wq = W[0:E].T * scale                  # fold score scale into Q
        wk = W[E:2 * E].T
        wv = W[2 * E:3 * E].T
        w_qkv.append(jnp.concatenate([wq, wk, wv], axis=1))        # (E, 3E)
        b_qkv.append(jnp.concatenate([b[0:E] * scale, b[E:3 * E]])[None, :])
        w_o.append(W[3 * E:4 * E].T)                               # (E, E)
        b_o.append(b[3 * E:4 * E][None, :])                        # (1, E)
        w_f1.append(lyr["ff_w1"].T)                                # (E, FF)
        b_f1.append(lyr["ff_b1"][None, :])                         # (1, FF)
        w_f2.append(lyr["ff_w2"].T)                                # (FF, E)
        b_f2.append(lyr["ff_b2"][None, :])                         # (1, E)
        scales.append(jnp.stack([lyr["scale0"], lyr["scale1"]]))

    pack = lambda xs: jnp.stack(xs).astype(jnp.float32)
    return dict(w_qkv=pack(w_qkv), b_qkv=pack(b_qkv),
                w_o=pack(w_o), b_o=pack(b_o),
                w_f1=pack(w_f1), b_f1=pack(b_f1),
                w_f2=pack(w_f2), b_f2=pack(b_f2),
                scales=pack(scales))


# ----------------------------- Pallas wrapper --------------------------------


def encoder_forward(packed, src_inputs, src_mask, num_heads):
    """Full Encoder forward (post-act, ScaleNorm, eval-mode dropout=identity)."""
    B, T, E = src_inputs.shape
    L = packed["w_qkv"].shape[0]
    FF = packed["w_f1"].shape[2]
    H = num_heads
    BT = B * T

    # Compact key-padding mask: (B, T) float, 1.0 = masked.
    mask2d = jnp.broadcast_to(src_mask, (B, 1, 1, T)).reshape(B, T)
    mask2d = mask2d.astype(jnp.float32)
    x2d = src_inputs.reshape(BT, E).astype(jnp.float32)

    kernel = functools.partial(_encoder_kernel, B=B, T=T, E=E, H=H, L=L,
                               eps=1e-5)

    out = pl.pallas_call(
        kernel,
        out_shape=jax.ShapeDtypeStruct((BT, E), jnp.float32),
        grid=(1,),
        in_specs=[
            pl.BlockSpec((B, T), lambda i: (0, 0)),
            pl.BlockSpec((BT, E), lambda i: (0, 0)),
            pl.BlockSpec((L, E, 3 * E), lambda i: (0, 0, 0)),
            pl.BlockSpec((L, 1, 3 * E), lambda i: (0, 0, 0)),
            pl.BlockSpec((L, E, E), lambda i: (0, 0, 0)),
            pl.BlockSpec((L, 1, E), lambda i: (0, 0, 0)),
            pl.BlockSpec((L, E, FF), lambda i: (0, 0, 0)),
            pl.BlockSpec((L, 1, FF), lambda i: (0, 0, 0)),
            pl.BlockSpec((L, FF, E), lambda i: (0, 0, 0)),
            pl.BlockSpec((L, 1, E), lambda i: (0, 0, 0)),
            pl.BlockSpec(memory_space=pltpu.SMEM),       # ScaleNorm scalars
        ],
        out_specs=pl.BlockSpec((BT, E), lambda i: (0, 0)),
        scratch_shapes=[pltpu.VMEM((BT, E), jnp.float32)],   # head-context slab
        compiler_params=pltpu.CompilerParams(
            dimension_semantics=("arbitrary",)),
    )(mask2d, x2d, packed["w_qkv"], packed["b_qkv"], packed["w_o"],
      packed["b_o"], packed["w_f1"], packed["b_f1"], packed["w_f2"],
      packed["b_f2"], packed["scales"])
    return out.reshape(B, T, E)


# ----------------------------- pure-JAX reference ----------------------------


def _ref_mha(x_q, x_kv, mask, W, b, H):
    B, Tq, E = x_q.shape
    Tk = x_kv.shape[1]
    Dh = E // H
    q = x_q @ W[0:E].T + b[0:E]
    k = x_kv @ W[E:2 * E].T + b[E:2 * E]
    v = x_kv @ W[2 * E:3 * E].T + b[2 * E:3 * E]
    sh = lambda t, T: t.reshape(B, T, H, Dh).transpose(0, 2, 1, 3)
    q, k, v = sh(q, Tq), sh(k, Tk), sh(v, Tk)
    s = jnp.einsum("bhqd,bhkd->bhqk", q, k) * (Dh ** -0.5)
    s = jnp.where(jnp.broadcast_to(mask, s.shape), -1e9, s)
    p = jax.nn.softmax(s, axis=-1)
    o = jnp.einsum("bhqk,bhkd->bhqd", p, v)
    o = o.transpose(0, 2, 1, 3).reshape(B, Tq, E)
    return o @ W[3 * E:4 * E].T + b[3 * E:4 * E]


def _ref_scalenorm(x, g, eps=1e-5):
    n = jnp.maximum(jnp.linalg.norm(x, axis=-1, keepdims=True), eps)
    return x * (g / n)


def _ref_encoder(params, src_inputs, src_mask, H):
    x = src_inputs                       # dropout = identity (eval)
    for lyr in params["layers"]:
        y = _ref_mha(x, x, src_mask, lyr["att_w"], lyr["att_b"], H)
        x = _ref_scalenorm(x + y, lyr["scale0"])
        h = jnp.maximum(x @ lyr["ff_w1"].T + lyr["ff_b1"], 0.0)
        y = h @ lyr["ff_w2"].T + lyr["ff_b2"]
        x = _ref_scalenorm(x + y, lyr["scale1"])
    return x


# ----------------------------- param init ------------------------------------


def init_params(key, num_layers, embed_dim, ff_dim):
    std_att = (2.0 / (5.0 * embed_dim)) ** 0.5
    std_ff = (2.0 / (ff_dim + embed_dim)) ** 0.5
    layers = []
    for _ in range(num_layers):
        key, k1, k2, k3 = jax.random.split(key, 4)
        layers.append(dict(
            att_w=std_att * jax.random.normal(k1, (4 * embed_dim, embed_dim),
                                              jnp.float32),
            att_b=jnp.zeros((4 * embed_dim,), jnp.float32),
            ff_w1=std_ff * jax.random.normal(k2, (ff_dim, embed_dim),
                                             jnp.float32),
            ff_b1=jnp.zeros((ff_dim,), jnp.float32),
            ff_w2=std_ff * jax.random.normal(k3, (embed_dim, ff_dim),
                                             jnp.float32),
            ff_b2=jnp.zeros((embed_dim,), jnp.float32),
            scale0=jnp.float32(embed_dim ** 0.5),
            scale1=jnp.float32(embed_dim ** 0.5),
        ))
    return {"layers": layers}


# ----------------------------- main -------------------------------------------


if __name__ == "__main__":
    B, T = 2, 8                  # batch, source seq
    E, H, FF = 32, 4, 64         # embed_dim, num_heads, ff_dim
    NUM_LAYERS = 2

    key = jax.random.PRNGKey(0)
    kp, kx = jax.random.split(key)
    params = init_params(kp, NUM_LAYERS, E, FF)
    src_inputs = jax.random.normal(kx, (B, T, E), jnp.float32)

    # source padding mask: True = masked; mask last 2 positions of batch 1
    pad = jnp.zeros((B, T), bool).at[1, T - 2:].set(True)
    src_mask = pad.reshape(B, 1, 1, T)

    # pack / transpose / scale-fold weights ONCE, outside the jitted hot path
    packed = jax.tree_util.tree_map(jax.block_until_ready,
                                    pack_params(params, H))

    fwd = jax.jit(functools.partial(encoder_forward, num_heads=H))
    out = jax.block_until_ready(fwd(packed, src_inputs, src_mask))

    ref = _ref_encoder(params, src_inputs, src_mask, H)
    assert out.shape == (B, T, E)
    assert jnp.allclose(out, ref, rtol=2e-3, atol=2e-3), "mismatch vs reference"

    print("KERNEL_OK")
</pallas_src>

<mosaic_0001>
module attributes {stable_mosaic.version = 11 : i64} {
  func.func @_encoder_kernel(%arg0: i32, %arg1: memref<2x8xf32, #tpu.memory_space<vmem>>, %arg2: memref<16x32xf32, #tpu.memory_space<vmem>>, %arg3: memref<2x32x96xf32, #tpu.memory_space<vmem>>, %arg4: memref<2x1x96xf32, #tpu.memory_space<vmem>>, %arg5: memref<2x32x32xf32, #tpu.memory_space<vmem>>, %arg6: memref<2x1x32xf32, #tpu.memory_space<vmem>>, %arg7: memref<2x32x64xf32, #tpu.memory_space<vmem>>, %arg8: memref<2x1x64xf32, #tpu.memory_space<vmem>>, %arg9: memref<2x64x32xf32, #tpu.memory_space<vmem>>, %arg10: memref<2x1x32xf32, #tpu.memory_space<vmem>>, %arg11: memref<2x2xf32, #tpu.memory_space<smem>>, %arg12: memref<16x32xf32, #tpu.memory_space<vmem>>, %arg13: memref<16x32xf32, #tpu.memory_space<vmem>>) attributes {dimension_semantics = [#tpu.dimension_semantics<arbitrary>], iteration_bounds = array<i64: 1>, scalar_prefetch = 0 : i64, scratch_operands = 1 : i64, tpu.core_type = #tpu.core_type<tc>, window_params = [{pipeline_mode = #tpu.pipeline_mode<synchronous>, transform_indices = @transform_0, window_bounds = array<i64: 2, 8>}, {pipeline_mode = #tpu.pipeline_mode<synchronous>, transform_indices = @transform_1, window_bounds = array<i64: 16, 32>}, {pipeline_mode = #tpu.pipeline_mode<synchronous>, transform_indices = @transform_2, window_bounds = array<i64: 2, 32, 96>}, {pipeline_mode = #tpu.pipeline_mode<synchronous>, transform_indices = @transform_3, window_bounds = array<i64: 2, 1, 96>}, {pipeline_mode = #tpu.pipeline_mode<synchronous>, transform_indices = @transform_4, window_bounds = array<i64: 2, 32, 32>}, {pipeline_mode = #tpu.pipeline_mode<synchronous>, transform_indices = @transform_5, window_bounds = array<i64: 2, 1, 32>}, {pipeline_mode = #tpu.pipeline_mode<synchronous>, transform_indices = @transform_6, window_bounds = array<i64: 2, 32, 64>}, {pipeline_mode = #tpu.pipeline_mode<synchronous>, transform_indices = @transform_7, window_bounds = array<i64: 2, 1, 64>}, {pipeline_mode = #tpu.pipeline_mode<synchronous>, transform_indices = @transform_8, window_bounds = array<i64: 2, 64, 32>}, {pipeline_mode = #tpu.pipeline_mode<synchronous>, transform_indices = @transform_9, window_bounds = array<i64: 2, 1, 32>}, {transform_indices = @transform_10, window_bounds = array<i64: 2, 2>}, {pipeline_mode = #tpu.pipeline_mode<synchronous>, transform_indices = @transform_11, window_bounds = array<i64: 16, 32>}]} {
    %c0 = arith.constant 0 : index
    %c0_0 = arith.constant 0 : index
    %0 = vector.load %arg2[%c0, %c0_0] : memref<16x32xf32, #tpu.memory_space<vmem>>, vector<16x32xf32>
    %c0_1 = arith.constant 0 : index
    %c0_2 = arith.constant 0 : index
    %1 = vector.load %arg1[%c0_1, %c0_2] : memref<2x8xf32, #tpu.memory_space<vmem>>, vector<2x8xf32>
    %cst = arith.constant -1.000000e+09 : f32
    %2 = vector.broadcast %cst : f32 to vector<2x8xf32>
    %3 = arith.mulf %1, %2 : vector<2x8xf32>
    %4 = vector.shape_cast %3 : vector<2x8xf32> to vector<2x1x8xf32>
    %5 = vector.shape_cast %4 : vector<2x1x8xf32> to vector<2x1x8xf32>
    %6 = vector.broadcast %5 : vector<2x1x8xf32> to vector<2x8x8xf32>
    %c0_3 = arith.constant 0 : index
    %c0_4 = arith.constant 0 : index
    %c0_5 = arith.constant 0 : index
    %7 = vector.load %arg3[%c0_3, %c0_4, %c0_5] : memref<2x32x96xf32, #tpu.memory_space<vmem>>, vector<1x32x96xf32>
    %8 = vector.shape_cast %7 : vector<1x32x96xf32> to vector<32x96xf32>
    %cst_6 = arith.constant dense<0.000000e+00> : vector<16x96xf32>
    %9 = tpu.matmul %0, %8, %cst_6 {dimension_numbers = #tpu.dot_dimension_numbers<[1], [0], [0], [1], [0, 0, 1, 1], [], []>} : vector<16x32xf32>, vector<32x96xf32>, vector<16x96xf32> -> vector<16x96xf32>
    %c0_7 = arith.constant 0 : index
    %c0_8 = arith.constant 0 : index
    %c0_9 = arith.constant 0 : index
    %10 = vector.load %arg4[%c0_7, %c0_8, %c0_9] : memref<2x1x96xf32, #tpu.memory_space<vmem>>, vector<1x1x96xf32>
    %11 = vector.shape_cast %10 : vector<1x1x96xf32> to vector<1x96xf32>
    %12 = vector.broadcast %11 : vector<1x96xf32> to vector<16x96xf32>
    %13 = arith.addf %9, %12 : vector<16x96xf32>
    %14 = vector.shape_cast %13 : vector<16x96xf32> to vector<2x8x96xf32>
    %15 = vector.extract_strided_slice %14 {offsets = [0, 0, 0], sizes = [2, 8, 8], strides = [1, 1, 1]} : vector<2x8x96xf32> to vector<2x8x8xf32>
    %16 = vector.extract_strided_slice %14 {offsets = [0, 0, 32], sizes = [2, 8, 8], strides = [1, 1, 1]} : vector<2x8x96xf32> to vector<2x8x8xf32>
    %17 = vector.extract_strided_slice %14 {offsets = [0, 0, 64], sizes = [2, 8, 8], strides = [1, 1, 1]} : vector<2x8x96xf32> to vector<2x8x8xf32>
    "tpu.trace_start"() <{level = 10 : i32, message = "bqd,bkd->bqk"}> : () -> ()
    %cst_10 = arith.constant dense<0.000000e+00> : vector<2x8x8xf32>
    %18 = tpu.matmul %15, %16, %cst_10 {dimension_numbers = #tpu.dot_dimension_numbers<[2], [2], [1], [1], [0, 0, 0, 1, 1, 1], [0], [0]>} : vector<2x8x8xf32>, vector<2x8x8xf32>, vector<2x8x8xf32> -> vector<2x8x8xf32>
    "tpu.trace_stop"() : () -> ()
    %19 = arith.addf %18, %6 : vector<2x8x8xf32>
    %cst_11 = arith.constant dense<0xFF800000> : vector<2x8xf32>
    %20 = vector.multi_reduction <maximumf>, %19, %cst_11 [2] : vector<2x8x8xf32> to vector<2x8xf32>
    %21 = vector.shape_cast %20 : vector<2x8xf32> to vector<2x8x1xf32>
    %22 = vector.broadcast %21 : vector<2x8x1xf32> to vector<2x8x8xf32>
    %23 = arith.subf %19, %22 : vector<2x8x8xf32>
    %24 = math.exp %23 : vector<2x8x8xf32>
    %cst_12 = arith.constant dense<0.000000e+00> : vector<2x8xf32>
    %25 = vector.multi_reduction <add>, %24, %cst_12 [2] : vector<2x8x8xf32> to vector<2x8xf32>
    %26 = vector.shape_cast %25 : vector<2x8xf32> to vector<2x8x1xf32>
    %27 = tpu.reciprocal %26 {approx = true} : vector<2x8x1xf32> -> vector<2x8x1xf32>
    %28 = vector.broadcast %27 : vector<2x8x1xf32> to vector<2x8x8xf32>
    %29 = arith.mulf %24, %28 : vector<2x8x8xf32>
    "tpu.trace_start"() <{level = 10 : i32, message = "bqk,bkd->bqd"}> : () -> ()
    %cst_13 = arith.constant dense<0.000000e+00> : vector<2x8x8xf32>
    %30 = tpu.matmul %29, %17, %cst_13 {dimension_numbers = #tpu.dot_dimension_numbers<[2], [1], [1], [2], [0, 0, 0, 1, 1, 2], [0], [0]>} : vector<2x8x8xf32>, vector<2x8x8xf32>, vector<2x8x8xf32> -> vector<2x8x8xf32>
    "tpu.trace_stop"() : () -> ()
    %31 = vector.shape_cast %30 : vector<2x8x8xf32> to vector<16x8xf32>
    %c0_14 = arith.constant 0 : index
    %c0_15 = arith.constant 0 : index
    %32 = vector.load %arg13[%c0_14, %c0_15] : memref<16x32xf32, #tpu.memory_space<vmem>>, vector<16x8xf32>
    tpu.vector_store %arg13[%c0_14, %c0_15], %31 {strides = array<i32>} : memref<16x32xf32, #tpu.memory_space<vmem>>, vector<16x8xf32>,
    %33 = vector.extract_strided_slice %14 {offsets = [0, 0, 8], sizes = [2, 8, 8], strides = [1, 1, 1]} : vector<2x8x96xf32> to vector<2x8x8xf32>
    %34 = vector.extract_strided_slice %14 {offsets = [0, 0, 40], sizes = [2, 8, 8], strides = [1, 1, 1]} : vector<2x8x96xf32> to vector<2x8x8xf32>
    %35 = vector.extract_strided_slice %14 {offsets = [0, 0, 72], sizes = [2, 8, 8], strides = [1, 1, 1]} : vector<2x8x96xf32> to vector<2x8x8xf32>
    "tpu.trace_start"() <{level = 10 : i32, message = "bqd,bkd->bqk"}> : () -> ()
    %cst_16 = arith.constant dense<0.000000e+00> : vector<2x8x8xf32>
    %36 = tpu.matmul %33, %34, %cst_16 {dimension_numbers = #tpu.dot_dimension_numbers<[2], [2], [1], [1], [0, 0, 0, 1, 1, 1], [0], [0]>} : vector<2x8x8xf32>, vector<2x8x8xf32>, vector<2x8x8xf32> -> vector<2x8x8xf32>
    "tpu.trace_stop"() : () -> ()
    %37 = arith.addf %36, %6 : vector<2x8x8xf32>
    %cst_17 = arith.constant dense<0xFF800000> : vector<2x8xf32>
    %38 = vector.multi_reduction <maximumf>, %37, %cst_17 [2] : vector<2x8x8xf32> to vector<2x8xf32>
    %39 = vector.shape_cast %38 : vector<2x8xf32> to vector<2x8x1xf32>
    %40 = vector.broadcast %39 : vector<2x8x1xf32> to vector<2x8x8xf32>
    %41 = arith.subf %37, %40 : vector<2x8x8xf32>
    %42 = math.exp %41 : vector<2x8x8xf32>
    %cst_18 = arith.constant dense<0.000000e+00> : vector<2x8xf32>
    %43 = vector.multi_reduction <add>, %42, %cst_18 [2] : vector<2x8x8xf32> to vector<2x8xf32>
    %44 = vector.shape_cast %43 : vector<2x8xf32> to vector<2x8x1xf32>
    %45 = tpu.reciprocal %44 {approx = true} : vector<2x8x1xf32> -> vector<2x8x1xf32>
    %46 = vector.broadcast %45 : vector<2x8x1xf32> to vector<2x8x8xf32>
    %47 = arith.mulf %42, %46 : vector<2x8x8xf32>
    "tpu.trace_start"() <{level = 10 : i32, message = "bqk,bkd->bqd"}> : () -> ()
    %cst_19 = arith.constant dense<0.000000e+00> : vector<2x8x8xf32>
    %48 = tpu.matmul %47, %35, %cst_19 {dimension_numbers = #tpu.dot_dimension_numbers<[2], [1], [1], [2], [0, 0, 0, 1, 1, 2], [0], [0]>} : vector<2x8x8xf32>, vector<2x8x8xf32>, vector<2x8x8xf32> -> vector<2x8x8xf32>
    "tpu.trace_stop"() : () -> ()
    %49 = vector.shape_cast %48 : vector<2x8x8xf32> to vector<16x8xf32>
    %c0_20 = arith.constant 0 : index
    %c8 = arith.constant 8 : index
    %50 = vector.load %arg13[%c0_20, %c8] : memref<16x32xf32, #tpu.memory_space<vmem>>, vector<16x8xf32>
    tpu.vector_store %arg13[%c0_20, %c8], %49 {strides = array<i32>} : memref<16x32xf32, #tpu.memory_space<vmem>>, vector<16x8xf32>,
    %51 = vector.extract_strided_slice %14 {offsets = [0, 0, 16], sizes = [2, 8, 8], strides = [1, 1, 1]} : vector<2x8x96xf32> to vector<2x8x8xf32>
    %52 = vector.extract_strided_slice %14 {offsets = [0, 0, 48], sizes = [2, 8, 8], strides = [1, 1, 1]} : vector<2x8x96xf32> to vector<2x8x8xf32>
    %53 = vector.extract_strided_slice %14 {offsets = [0, 0, 80], sizes = [2, 8, 8], strides = [1, 1, 1]} : vector<2x8x96xf32> to vector<2x8x8xf32>
    "tpu.trace_start"() <{level = 10 : i32, message = "bqd,bkd->bqk"}> : () -> ()
    %cst_21 = arith.constant dense<0.000000e+00> : vector<2x8x8xf32>
    %54 = tpu.matmul %51, %52, %cst_21 {dimension_numbers = #tpu.dot_dimension_numbers<[2], [2], [1], [1], [0, 0, 0, 1, 1, 1], [0], [0]>} : vector<2x8x8xf32>, vector<2x8x8xf32>, vector<2x8x8xf32> -> vector<2x8x8xf32>
    "tpu.trace_stop"() : () -> ()
    %55 = arith.addf %54, %6 : vector<2x8x8xf32>
    %cst_22 = arith.constant dense<0xFF800000> : vector<2x8xf32>
    %56 = vector.multi_reduction <maximumf>, %55, %cst_22 [2] : vector<2x8x8xf32> to vector<2x8xf32>
    %57 = vector.shape_cast %56 : vector<2x8xf32> to vector<2x8x1xf32>
    %58 = vector.broadcast %57 : vector<2x8x1xf32> to vector<2x8x8xf32>
    %59 = arith.subf %55, %58 : vector<2x8x8xf32>
    %60 = math.exp %59 : vector<2x8x8xf32>
    %cst_23 = arith.constant dense<0.000000e+00> : vector<2x8xf32>
    %61 = vector.multi_reduction <add>, %60, %cst_23 [2] : vector<2x8x8xf32> to vector<2x8xf32>
    %62 = vector.shape_cast %61 : vector<2x8xf32> to vector<2x8x1xf32>
    %63 = tpu.reciprocal %62 {approx = true} : vector<2x8x1xf32> -> vector<2x8x1xf32>
    %64 = vector.broadcast %63 : vector<2x8x1xf32> to vector<2x8x8xf32>
    %65 = arith.mulf %60, %64 : vector<2x8x8xf32>
    "tpu.trace_start"() <{level = 10 : i32, message = "bqk,bkd->bqd"}> : () -> ()
    %cst_24 = arith.constant dense<0.000000e+00> : vector<2x8x8xf32>
    %66 = tpu.matmul %65, %53, %cst_24 {dimension_numbers = #tpu.dot_dimension_numbers<[2], [1], [1], [2], [0, 0, 0, 1, 1, 2], [0], [0]>} : vector<2x8x8xf32>, vector<2x8x8xf32>, vector<2x8x8xf32> -> vector<2x8x8xf32>
    "tpu.trace_stop"() : () -> ()
    %67 = vector.shape_cast %66 : vector<2x8x8xf32> to vector<16x8xf32>
    %c0_25 = arith.constant 0 : index
    %c16 = arith.constant 16 : index
    %68 = vector.load %arg13[%c0_25, %c16] : memref<16x32xf32, #tpu.memory_space<vmem>>, vector<16x8xf32>
    tpu.vector_store %arg13[%c0_25, %c16], %67 {strides = array<i32>} : memref<16x32xf32, #tpu.memory_space<vmem>>, vector<16x8xf32>,
    %69 = vector.extract_strided_slice %14 {offsets = [0, 0, 24], sizes = [2, 8, 8], strides = [1, 1, 1]} : vector<2x8x96xf32> to vector<2x8x8xf32>
    %70 = vector.extract_strided_slice %14 {offsets = [0, 0, 56], sizes = [2, 8, 8], strides = [1, 1, 1]} : vector<2x8x96xf32> to vector<2x8x8xf32>
    %71 = vector.extract_strided_slice %14 {offsets = [0, 0, 88], sizes = [2, 8, 8], strides = [1, 1, 1]} : vector<2x8x96xf32> to vector<2x8x8xf32>
    "tpu.trace_start"() <{level = 10 : i32, message = "bqd,bkd->bqk"}> : () -> ()
    %cst_26 = arith.constant dense<0.000000e+00> : vector<2x8x8xf32>
    %72 = tpu.matmul %69, %70, %cst_26 {dimension_numbers = #tpu.dot_dimension_numbers<[2], [2], [1], [1], [0, 0, 0, 1, 1, 1], [0], [0]>} : vector<2x8x8xf32>, vector<2x8x8xf32>, vector<2x8x8xf32> -> vector<2x8x8xf32>
    "tpu.trace_stop"() : () -> ()
    %73 = arith.addf %72, %6 : vector<2x8x8xf32>
    %cst_27 = arith.constant dense<0xFF800000> : vector<2x8xf32>
    %74 = vector.multi_reduction <maximumf>, %73, %cst_27 [2] : vector<2x8x8xf32> to vector<2x8xf32>
    %75 = vector.shape_cast %74 : vector<2x8xf32> to vector<2x8x1xf32>
    %76 = vector.broadcast %75 : vector<2x8x1xf32> to vector<2x8x8xf32>
    %77 = arith.subf %73, %76 : vector<2x8x8xf32>
    %78 = math.exp %77 : vector<2x8x8xf32>
    %cst_28 = arith.constant dense<0.000000e+00> : vector<2x8xf32>
    %79 = vector.multi_reduction <add>, %78, %cst_28 [2] : vector<2x8x8xf32> to vector<2x8xf32>
    %80 = vector.shape_cast %79 : vector<2x8xf32> to vector<2x8x1xf32>
    %81 = tpu.reciprocal %80 {approx = true} : vector<2x8x1xf32> -> vector<2x8x1xf32>
    %82 = vector.broadcast %81 : vector<2x8x1xf32> to vector<2x8x8xf32>
    %83 = arith.mulf %78, %82 : vector<2x8x8xf32>
    "tpu.trace_start"() <{level = 10 : i32, message = "bqk,bkd->bqd"}> : () -> ()
    %cst_29 = arith.constant dense<0.000000e+00> : vector<2x8x8xf32>
    %84 = tpu.matmul %83, %71, %cst_29 {dimension_numbers = #tpu.dot_dimension_numbers<[2], [1], [1], [2], [0, 0, 0, 1, 1, 2], [0], [0]>} : vector<2x8x8xf32>, vector<2x8x8xf32>, vector<2x8x8xf32> -> vector<2x8x8xf32>
    "tpu.trace_stop"() : () -> ()
    %85 = vector.shape_cast %84 : vector<2x8x8xf32> to vector<16x8xf32>
    %c0_30 = arith.constant 0 : index
    %c24 = arith.constant 24 : index
    %86 = vector.load %arg13[%c0_30, %c24] : memref<16x32xf32, #tpu.memory_space<vmem>>, vector<16x8xf32>
    tpu.vector_store %arg13[%c0_30, %c24], %85 {strides = array<i32>} : memref<16x32xf32, #tpu.memory_space<vmem>>, vector<16x8xf32>,
    %c0_31 = arith.constant 0 : index
    %c0_32 = arith.constant 0 : index
    %87 = vector.load %arg13[%c0_31, %c0_32] : memref<16x32xf32, #tpu.memory_space<vmem>>, vector<16x32xf32>
    %c0_33 = arith.constant 0 : index
    %c0_34 = arith.constant 0 : index
    %c0_35 = arith.constant 0 : index
    %88 = vector.load %arg5[%c0_33, %c0_34, %c0_35] : memref<2x32x32xf32, #tpu.memory_space<vmem>>, vector<1x32x32xf32>
    %89 = vector.shape_cast %88 : vector<1x32x32xf32> to vector<32x32xf32>
    %cst_36 = arith.constant dense<0.000000e+00> : vector<16x32xf32>
    %90 = tpu.matmul %87, %89, %cst_36 {dimension_numbers = #tpu.dot_dimension_numbers<[1], [0], [0], [1], [0, 0, 1, 1], [], []>} : vector<16x32xf32>, vector<32x32xf32>, vector<16x32xf32> -> vector<16x32xf32>
    %c0_37 = arith.constant 0 : index
    %c0_38 = arith.constant 0 : index
    %c0_39 = arith.constant 0 : index
    %91 = vector.load %arg6[%c0_37, %c0_38, %c0_39] : memref<2x1x32xf32, #tpu.memory_space<vmem>>, vector<1x1x32xf32>
    %92 = vector.shape_cast %91 : vector<1x1x32xf32> to vector<1x32xf32>
    %93 = vector.broadcast %92 : vector<1x32xf32> to vector<16x32xf32>
    %94 = arith.addf %90, %93 : vector<16x32xf32>
    %95 = arith.addf %0, %94 : vector<16x32xf32>
    %c0_40 = arith.constant 0 : index
    %c0_41 = arith.constant 0 : index
    %96 = memref.load %arg11[%c0_40, %c0_41] : memref<2x2xf32, #tpu.memory_space<smem>>
    %97 = arith.mulf %95, %95 : vector<16x32xf32>
    %cst_42 = arith.constant dense<0.000000e+00> : vector<16xf32>
    %98 = vector.multi_reduction <add>, %97, %cst_42 [1] : vector<16x32xf32> to vector<16xf32>
    %99 = vector.shape_cast %98 : vector<16xf32> to vector<16x1xf32>
    %cst_43 = arith.constant 1.000000e-10 : f32
    %100 = vector.broadcast %cst_43 : f32 to vector<16x1xf32>
    %101 = arith.maximumf %99, %100 : vector<16x1xf32>
    %102 = math.rsqrt %101 : vector<16x1xf32>
    %103 = vector.broadcast %96 : f32 to vector<16x1xf32>
    %104 = arith.mulf %103, %102 : vector<16x1xf32>
    %105 = vector.broadcast %104 : vector<16x1xf32> to vector<16x32xf32>
    %106 = arith.mulf %95, %105 : vector<16x32xf32>
    %c0_44 = arith.constant 0 : index
    %c0_45 = arith.constant 0 : index
    %c0_46 = arith.constant 0 : index
    %107 = vector.load %arg7[%c0_44, %c0_45, %c0_46] : memref<2x32x64xf32, #tpu.memory_space<vmem>>, vector<1x32x64xf32>
    %108 = vector.shape_cast %107 : vector<1x32x64xf32> to vector<32x64xf32>
    %cst_47 = arith.constant dense<0.000000e+00> : vector<16x64xf32>
    %109 = tpu.matmul %106, %108, %cst_47 {dimension_numbers = #tpu.dot_dimension_numbers<[1], [0], [0], [1], [0, 0, 1, 1], [], []>} : vector<16x32xf32>, vector<32x64xf32>, vector<16x64xf32> -> vector<16x64xf32>
    %c0_48 = arith.constant 0 : index
    %c0_49 = arith.constant 0 : index
    %c0_50 = arith.constant 0 : index
    %110 = vector.load %arg8[%c0_48, %c0_49, %c0_50] : memref<2x1x64xf32, #tpu.memory_space<vmem>>, vector<1x1x64xf32>
    %111 = vector.shape_cast %110 : vector<1x1x64xf32> to vector<1x64xf32>
    %112 = vector.broadcast %111 : vector<1x64xf32> to vector<16x64xf32>
    %113 = arith.addf %109, %112 : vector<16x64xf32>
    %cst_51 = arith.constant 0.000000e+00 : f32
    %114 = vector.broadcast %cst_51 : f32 to vector<16x64xf32>
    %115 = arith.maximumf %113, %114 : vector<16x64xf32>
    %c0_52 = arith.constant 0 : index
    %c0_53 = arith.constant 0 : index
    %c0_54 = arith.constant 0 : index
    %116 = vector.load %arg9[%c0_52, %c0_53, %c0_54] : memref<2x64x32xf32, #tpu.memory_space<vmem>>, vector<1x64x32xf32>
    %117 = vector.shape_cast %116 : vector<1x64x32xf32> to vector<64x32xf32>
    %cst_55 = arith.constant dense<0.000000e+00> : vector<16x32xf32>
    %118 = tpu.matmul %115, %117, %cst_55 {dimension_numbers = #tpu.dot_dimension_numbers<[1], [0], [0], [1], [0, 0, 1, 1], [], []>} : vector<16x64xf32>, vector<64x32xf32>, vector<16x32xf32> -> vector<16x32xf32>
    %c0_56 = arith.constant 0 : index
    %c0_57 = arith.constant 0 : index
    %c0_58 = arith.constant 0 : index
    %119 = vector.load %arg10[%c0_56, %c0_57, %c0_58] : memref<2x1x32xf32, #tpu.memory_space<vmem>>, vector<1x1x32xf32>
    %120 = vector.shape_cast %119 : vector<1x1x32xf32> to vector<1x32xf32>
    %121 = vector.broadcast %120 : vector<1x32xf32> to vector<16x32xf32>
    %122 = arith.addf %118, %121 : vector<16x32xf32>
    %123 = arith.addf %106, %122 : vector<16x32xf32>
    %c0_59 = arith.constant 0 : index
    %c1 = arith.constant 1 : index
    %124 = memref.load %arg11[%c0_59, %c1] : memref<2x2xf32, #tpu.memory_space<smem>>
    %125 = arith.mulf %123, %123 : vector<16x32xf32>
    %cst_60 = arith.constant dense<0.000000e+00> : vector<16xf32>
    %126 = vector.multi_reduction <add>, %125, %cst_60 [1] : vector<16x32xf32> to vector<16xf32>
    %127 = vector.shape_cast %126 : vector<16xf32> to vector<16x1xf32>
    %cst_61 = arith.constant 1.000000e-10 : f32
    %128 = vector.broadcast %cst_61 : f32 to vector<16x1xf32>
    %129 = arith.maximumf %127, %128 : vector<16x1xf32>
    %130 = math.rsqrt %129 : vector<16x1xf32>
    %131 = vector.broadcast %124 : f32 to vector<16x1xf32>
    %132 = arith.mulf %131, %130 : vector<16x1xf32>
    %133 = vector.broadcast %132 : vector<16x1xf32> to vector<16x32xf32>
    %134 = arith.mulf %123, %133 : vector<16x32xf32>
    %c1_62 = arith.constant 1 : index
    %c0_63 = arith.constant 0 : index
    %c0_64 = arith.constant 0 : index
    %135 = vector.load %arg3[%c1_62, %c0_63, %c0_64] : memref<2x32x96xf32, #tpu.memory_space<vmem>>, vector<1x32x96xf32>
    %136 = vector.shape_cast %135 : vector<1x32x96xf32> to vector<32x96xf32>
    %cst_65 = arith.constant dense<0.000000e+00> : vector<16x96xf32>
    %137 = tpu.matmul %134, %136, %cst_65 {dimension_numbers = #tpu.dot_dimension_numbers<[1], [0], [0], [1], [0, 0, 1, 1], [], []>} : vector<16x32xf32>, vector<32x96xf32>, vector<16x96xf32> -> vector<16x96xf32>
    %c1_66 = arith.constant 1 : index
    %c0_67 = arith.constant 0 : index
    %c0_68 = arith.constant 0 : index
    %138 = vector.load %arg4[%c1_66, %c0_67, %c0_68] : memref<2x1x96xf32, #tpu.memory_space<vmem>>, vector<1x1x96xf32>
    %139 = vector.shape_cast %138 : vector<1x1x96xf32> to vector<1x96xf32>
    %140 = vector.broadcast %139 : vector<1x96xf32> to vector<16x96xf32>
    %141 = arith.addf %137, %140 : vector<16x96xf32>
    %142 = vector.shape_cast %141 : vector<16x96xf32> to vector<2x8x96xf32>
    %143 = vector.extract_strided_slice %142 {offsets = [0, 0, 0], sizes = [2, 8, 8], strides = [1, 1, 1]} : vector<2x8x96xf32> to vector<2x8x8xf32>
    %144 = vector.extract_strided_slice %142 {offsets = [0, 0, 32], sizes = [2, 8, 8], strides = [1, 1, 1]} : vector<2x8x96xf32> to vector<2x8x8xf32>
    %145 = vector.extract_strided_slice %142 {offsets = [0, 0, 64], sizes = [2, 8, 8], strides = [1, 1, 1]} : vector<2x8x96xf32> to vector<2x8x8xf32>
    "tpu.trace_start"() <{level = 10 : i32, message = "bqd,bkd->bqk"}> : () -> ()
    %cst_69 = arith.constant dense<0.000000e+00> : vector<2x8x8xf32>
    %146 = tpu.matmul %143, %144, %cst_69 {dimension_numbers = #tpu.dot_dimension_numbers<[2], [2], [1], [1], [0, 0, 0, 1, 1, 1], [0], [0]>} : vector<2x8x8xf32>, vector<2x8x8xf32>, vector<2x8x8xf32> -> vector<2x8x8xf32>
    "tpu.trace_stop"() : () -> ()
    %147 = arith.addf %146, %6 : vector<2x8x8xf32>
    %cst_70 = arith.constant dense<0xFF800000> : vector<2x8xf32>
    %148 = vector.multi_reduction <maximumf>, %147, %cst_70 [2] : vector<2x8x8xf32> to vector<2x8xf32>
    %149 = vector.shape_cast %148 : vector<2x8xf32> to vector<2x8x1xf32>
    %150 = vector.broadcast %149 : vector<2x8x1xf32> to vector<2x8x8xf32>
    %151 = arith.subf %147, %150 : vector<2x8x8xf32>
    %152 = math.exp %151 : vector<2x8x8xf32>
    %cst_71 = arith.constant dense<0.000000e+00> : vector<2x8xf32>
    %153 = vector.multi_reduction <add>, %152, %cst_71 [2] : vector<2x8x8xf32> to vector<2x8xf32>
    %154 = vector.shape_cast %153 : vector<2x8xf32> to vector<2x8x1xf32>
    %155 = tpu.reciprocal %154 {approx = true} : vector<2x8x1xf32> -> vector<2x8x1xf32>
    %156 = vector.broadcast %155 : vector<2x8x1xf32> to vector<2x8x8xf32>
    %157 = arith.mulf %152, %156 : vector<2x8x8xf32>
    "tpu.trace_start"() <{level = 10 : i32, message = "bqk,bkd->bqd"}> : () -> ()
    %cst_72 = arith.constant dense<0.000000e+00> : vector<2x8x8xf32>
    %158 = tpu.matmul %157, %145, %cst_72 {dimension_numbers = #tpu.dot_dimension_numbers<[2], [1], [1], [2], [0, 0, 0, 1, 1, 2], [0], [0]>} : vector<2x8x8xf32>, vector<2x8x8xf32>, vector<2x8x8xf32> -> vector<2x8x8xf32>
    "tpu.trace_stop"() : () -> ()
    %159 = vector.shape_cast %158 : vector<2x8x8xf32> to vector<16x8xf32>
    %c0_73 = arith.constant 0 : index
    %c0_74 = arith.constant 0 : index
    %160 = vector.load %arg13[%c0_73, %c0_74] : memref<16x32xf32, #tpu.memory_space<vmem>>, vector<16x8xf32>
    tpu.vector_store %arg13[%c0_73, %c0_74], %159 {strides = array<i32>} : memref<16x32xf32, #tpu.memory_space<vmem>>, vector<16x8xf32>,
    %161 = vector.extract_strided_slice %142 {offsets = [0, 0, 8], sizes = [2, 8, 8], strides = [1, 1, 1]} : vector<2x8x96xf32> to vector<2x8x8xf32>
    %162 = vector.extract_strided_slice %142 {offsets = [0, 0, 40], sizes = [2, 8, 8], strides = [1, 1, 1]} : vector<2x8x96xf32> to vector<2x8x8xf32>
    %163 = vector.extract_strided_slice %142 {offsets = [0, 0, 72], sizes = [2, 8, 8], strides = [1, 1, 1]} : vector<2x8x96xf32> to vector<2x8x8xf32>
    "tpu.trace_start"() <{level = 10 : i32, message = "bqd,bkd->bqk"}> : () -> ()
    %cst_75 = arith.constant dense<0.000000e+00> : vector<2x8x8xf32>
    %164 = tpu.matmul %161, %162, %cst_75 {dimension_numbers = #tpu.dot_dimension_numbers<[2], [2], [1], [1], [0, 0, 0, 1, 1, 1], [0], [0]>} : vector<2x8x8xf32>, vector<2x8x8xf32>, vector<2x8x8xf32> -> vector<2x8x8xf32>
    "tpu.trace_stop"() : () -> ()
    %165 = arith.addf %164, %6 : vector<2x8x8xf32>
    %cst_76 = arith.constant dense<0xFF800000> : vector<2x8xf32>
    %166 = vector.multi_reduction <maximumf>, %165, %cst_76 [2] : vector<2x8x8xf32> to vector<2x8xf32>
    %167 = vector.shape_cast %166 : vector<2x8xf32> to vector<2x8x1xf32>
    %168 = vector.broadcast %167 : vector<2x8x1xf32> to vector<2x8x8xf32>
    %169 = arith.subf %165, %168 : vector<2x8x8xf32>
    %170 = math.exp %169 : vector<2x8x8xf32>
    %cst_77 = arith.constant dense<0.000000e+00> : vector<2x8xf32>
    %171 = vector.multi_reduction <add>, %170, %cst_77 [2] : vector<2x8x8xf32> to vector<2x8xf32>
    %172 = vector.shape_cast %171 : vector<2x8xf32> to vector<2x8x1xf32>
    %173 = tpu.reciprocal %172 {approx = true} : vector<2x8x1xf32> -> vector<2x8x1xf32>
    %174 = vector.broadcast %173 : vector<2x8x1xf32> to vector<2x8x8xf32>
    %175 = arith.mulf %170, %174 : vector<2x8x8xf32>
    "tpu.trace_start"() <{level = 10 : i32, message = "bqk,bkd->bqd"}> : () -> ()
    %cst_78 = arith.constant dense<0.000000e+00> : vector<2x8x8xf32>
    %176 = tpu.matmul %175, %163, %cst_78 {dimension_numbers = #tpu.dot_dimension_numbers<[2], [1], [1], [2], [0, 0, 0, 1, 1, 2], [0], [0]>} : vector<2x8x8xf32>, vector<2x8x8xf32>, vector<2x8x8xf32> -> vector<2x8x8xf32>
    "tpu.trace_stop"() : () -> ()
    %177 = vector.shape_cast %176 : vector<2x8x8xf32> to vector<16x8xf32>
    %c0_79 = arith.constant 0 : index
    %c8_80 = arith.constant 8 : index
    %178 = vector.load %arg13[%c0_79, %c8_80] : memref<16x32xf32, #tpu.memory_space<vmem>>, vector<16x8xf32>
    tpu.vector_store %arg13[%c0_79, %c8_80], %177 {strides = array<i32>} : memref<16x32xf32, #tpu.memory_space<vmem>>, vector<16x8xf32>,
    %179 = vector.extract_strided_slice %142 {offsets = [0, 0, 16], sizes = [2, 8, 8], strides = [1, 1, 1]} : vector<2x8x96xf32> to vector<2x8x8xf32>
    %180 = vector.extract_strided_slice %142 {offsets = [0, 0, 48], sizes = [2, 8, 8], strides = [1, 1, 1]} : vector<2x8x96xf32> to vector<2x8x8xf32>
    %181 = vector.extract_strided_slice %142 {offsets = [0, 0, 80], sizes = [2, 8, 8], strides = [1, 1, 1]} : vector<2x8x96xf32> to vector<2x8x8xf32>
    "tpu.trace_start"() <{level = 10 : i32, message = "bqd,bkd->bqk"}> : () -> ()
    %cst_81 = arith.constant dense<0.000000e+00> : vector<2x8x8xf32>
    %182 = tpu.matmul %179, %180, %cst_81 {dimension_numbers = #tpu.dot_dimension_numbers<[2], [2], [1], [1], [0, 0, 0, 1, 1, 1], [0], [0]>} : vector<2x8x8xf32>, vector<2x8x8xf32>, vector<2x8x8xf32> -> vector<2x8x8xf32>
    "tpu.trace_stop"() : () -> ()
    %183 = arith.addf %182, %6 : vector<2x8x8xf32>
    %cst_82 = arith.constant dense<0xFF800000> : vector<2x8xf32>
    %184 = vector.multi_reduction <maximumf>, %183, %cst_82 [2] : vector<2x8x8xf32> to vector<2x8xf32>
    %185 = vector.shape_cast %184 : vector<2x8xf32> to vector<2x8x1xf32>
    %186 = vector.broadcast %185 : vector<2x8x1xf32> to vector<2x8x8xf32>
    %187 = arith.subf %183, %186 : vector<2x8x8xf32>
    %188 = math.exp %187 : vector<2x8x8xf32>
    %cst_83 = arith.constant dense<0.000000e+00> : vector<2x8xf32>
    %189 = vector.multi_reduction <add>, %188, %cst_83 [2] : vector<2x8x8xf32> to vector<2x8xf32>
    %190 = vector.shape_cast %189 : vector<2x8xf32> to vector<2x8x1xf32>
    %191 = tpu.reciprocal %190 {approx = true} : vector<2x8x1xf32> -> vector<2x8x1xf32>
    %192 = vector.broadcast %191 : vector<2x8x1xf32> to vector<2x8x8xf32>
    %193 = arith.mulf %188, %192 : vector<2x8x8xf32>
    "tpu.trace_start"() <{level = 10 : i32, message = "bqk,bkd->bqd"}> : () -> ()
    %cst_84 = arith.constant dense<0.000000e+00> : vector<2x8x8xf32>
    %194 = tpu.matmul %193, %181, %cst_84 {dimension_numbers = #tpu.dot_dimension_numbers<[2], [1], [1], [2], [0, 0, 0, 1, 1, 2], [0], [0]>} : vector<2x8x8xf32>, vector<2x8x8xf32>, vector<2x8x8xf32> -> vector<2x8x8xf32>
    "tpu.trace_stop"() : () -> ()
    %195 = vector.shape_cast %194 : vector<2x8x8xf32> to vector<16x8xf32>
    %c0_85 = arith.constant 0 : index
    %c16_86 = arith.constant 16 : index
    %196 = vector.load %arg13[%c0_85, %c16_86] : memref<16x32xf32, #tpu.memory_space<vmem>>, vector<16x8xf32>
    tpu.vector_store %arg13[%c0_85, %c16_86], %195 {strides = array<i32>} : memref<16x32xf32, #tpu.memory_space<vmem>>, vector<16x8xf32>,
    %197 = vector.extract_strided_slice %142 {offsets = [0, 0, 24], sizes = [2, 8, 8], strides = [1, 1, 1]} : vector<2x8x96xf32> to vector<2x8x8xf32>
    %198 = vector.extract_strided_slice %142 {offsets = [0, 0, 56], sizes = [2, 8, 8], strides = [1, 1, 1]} : vector<2x8x96xf32> to vector<2x8x8xf32>
    %199 = vector.extract_strided_slice %142 {offsets = [0, 0, 88], sizes = [2, 8, 8], strides = [1, 1, 1]} : vector<2x8x96xf32> to vector<2x8x8xf32>
    "tpu.trace_start"() <{level = 10 : i32, message = "bqd,bkd->bqk"}> : () -> ()
    %cst_87 = arith.constant dense<0.000000e+00> : vector<2x8x8xf32>
    %200 = tpu.matmul %197, %198, %cst_87 {dimension_numbers = #tpu.dot_dimension_numbers<[2], [2], [1], [1], [0, 0, 0, 1, 1, 1], [0], [0]>} : vector<2x8x8xf32>, vector<2x8x8xf32>, vector<2x8x8xf32> -> vector<2x8x8xf32>
    "tpu.trace_stop"() : () -> ()
    %201 = arith.addf %200, %6 : vector<2x8x8xf32>
    %cst_88 = arith.constant dense<0xFF800000> : vector<2x8xf32>
    %202 = vector.multi_reduction <maximumf>, %201, %cst_88 [2] : vector<2x8x8xf32> to vector<2x8xf32>
    %203 = vector.shape_cast %202 : vector<2x8xf32> to vector<2x8x1xf32>
    %204 = vector.broadcast %203 : vector<2x8x1xf32> to vector<2x8x8xf32>
    %205 = arith.subf %201, %204 : vector<2x8x8xf32>
    %206 = math.exp %205 : vector<2x8x8xf32>
    %cst_89 = arith.constant dense<0.000000e+00> : vector<2x8xf32>
    %207 = vector.multi_reduction <add>, %206, %cst_89 [2] : vector<2x8x8xf32> to vector<2x8xf32>
    %208 = vector.shape_cast %207 : vector<2x8xf32> to vector<2x8x1xf32>
    %209 = tpu.reciprocal %208 {approx = true} : vector<2x8x1xf32> -> vector<2x8x1xf32>
    %210 = vector.broadcast %209 : vector<2x8x1xf32> to vector<2x8x8xf32>
    %211 = arith.mulf %206, %210 : vector<2x8x8xf32>
    "tpu.trace_start"() <{level = 10 : i32, message = "bqk,bkd->bqd"}> : () -> ()
    %cst_90 = arith.constant dense<0.000000e+00> : vector<2x8x8xf32>
    %212 = tpu.matmul %211, %199, %cst_90 {dimension_numbers = #tpu.dot_dimension_numbers<[2], [1], [1], [2], [0, 0, 0, 1, 1, 2], [0], [0]>} : vector<2x8x8xf32>, vector<2x8x8xf32>, vector<2x8x8xf32> -> vector<2x8x8xf32>
    "tpu.trace_stop"() : () -> ()
    %213 = vector.shape_cast %212 : vector<2x8x8xf32> to vector<16x8xf32>
    %c0_91 = arith.constant 0 : index
    %c24_92 = arith.constant 24 : index
    %214 = vector.load %arg13[%c0_91, %c24_92] : memref<16x32xf32, #tpu.memory_space<vmem>>, vector<16x8xf32>
    tpu.vector_store %arg13[%c0_91, %c24_92], %213 {strides = array<i32>} : memref<16x32xf32, #tpu.memory_space<vmem>>, vector<16x8xf32>,
    %c0_93 = arith.constant 0 : index
    %c0_94 = arith.constant 0 : index
    %215 = vector.load %arg13[%c0_93, %c0_94] : memref<16x32xf32, #tpu.memory_space<vmem>>, vector<16x32xf32>
    %c1_95 = arith.constant 1 : index
    %c0_96 = arith.constant 0 : index
    %c0_97 = arith.constant 0 : index
    %216 = vector.load %arg5[%c1_95, %c0_96, %c0_97] : memref<2x32x32xf32, #tpu.memory_space<vmem>>, vector<1x32x32xf32>
    %217 = vector.shape_cast %216 : vector<1x32x32xf32> to vector<32x32xf32>
    %cst_98 = arith.constant dense<0.000000e+00> : vector<16x32xf32>
    %218 = tpu.matmul %215, %217, %cst_98 {dimension_numbers = #tpu.dot_dimension_numbers<[1], [0], [0], [1], [0, 0, 1, 1], [], []>} : vector<16x32xf32>, vector<32x32xf32>, vector<16x32xf32> -> vector<16x32xf32>
    %c1_99 = arith.constant 1 : index
    %c0_100 = arith.constant 0 : index
    %c0_101 = arith.constant 0 : index
    %219 = vector.load %arg6[%c1_99, %c0_100, %c0_101] : memref<2x1x32xf32, #tpu.memory_space<vmem>>, vector<1x1x32xf32>
    %220 = vector.shape_cast %219 : vector<1x1x32xf32> to vector<1x32xf32>
    %221 = vector.broadcast %220 : vector<1x32xf32> to vector<16x32xf32>
    %222 = arith.addf %218, %221 : vector<16x32xf32>
    %223 = arith.addf %134, %222 : vector<16x32xf32>
    %c1_102 = arith.constant 1 : index
    %c0_103 = arith.constant 0 : index
    %224 = memref.load %arg11[%c1_102, %c0_103] : memref<2x2xf32, #tpu.memory_space<smem>>
    %225 = arith.mulf %223, %223 : vector<16x32xf32>
    %cst_104 = arith.constant dense<0.000000e+00> : vector<16xf32>
    %226 = vector.multi_reduction <add>, %225, %cst_104 [1] : vector<16x32xf32> to vector<16xf32>
    %227 = vector.shape_cast %226 : vector<16xf32> to vector<16x1xf32>
    %cst_105 = arith.constant 1.000000e-10 : f32
    %228 = vector.broadcast %cst_105 : f32 to vector<16x1xf32>
    %229 = arith.maximumf %227, %228 : vector<16x1xf32>
    %230 = math.rsqrt %229 : vector<16x1xf32>
    %231 = vector.broadcast %224 : f32 to vector<16x1xf32>
    %232 = arith.mulf %231, %230 : vector<16x1xf32>
    %233 = vector.broadcast %232 : vector<16x1xf32> to vector<16x32xf32>
    %234 = arith.mulf %223, %233 : vector<16x32xf32>
    %c1_106 = arith.constant 1 : index
    %c0_107 = arith.constant 0 : index
    %c0_108 = arith.constant 0 : index
    %235 = vector.load %arg7[%c1_106, %c0_107, %c0_108] : memref<2x32x64xf32, #tpu.memory_space<vmem>>, vector<1x32x64xf32>
    %236 = vector.shape_cast %235 : vector<1x32x64xf32> to vector<32x64xf32>
    %cst_109 = arith.constant dense<0.000000e+00> : vector<16x64xf32>
    %237 = tpu.matmul %234, %236, %cst_109 {dimension_numbers = #tpu.dot_dimension_numbers<[1], [0], [0], [1], [0, 0, 1, 1], [], []>} : vector<16x32xf32>, vector<32x64xf32>, vector<16x64xf32> -> vector<16x64xf32>
    %c1_110 = arith.constant 1 : index
    %c0_111 = arith.constant 0 : index
    %c0_112 = arith.constant 0 : index
    %238 = vector.load %arg8[%c1_110, %c0_111, %c0_112] : memref<2x1x64xf32, #tpu.memory_space<vmem>>, vector<1x1x64xf32>
    %239 = vector.shape_cast %238 : vector<1x1x64xf32> to vector<1x64xf32>
    %240 = vector.broadcast %239 : vector<1x64xf32> to vector<16x64xf32>
    %241 = arith.addf %237, %240 : vector<16x64xf32>
    %cst_113 = arith.constant 0.000000e+00 : f32
    %242 = vector.broadcast %cst_113 : f32 to vector<16x64xf32>
    %243 = arith.maximumf %241, %242 : vector<16x64xf32>
    %c1_114 = arith.constant 1 : index
    %c0_115 = arith.constant 0 : index
    %c0_116 = arith.constant 0 : index
    %244 = vector.load %arg9[%c1_114, %c0_115, %c0_116] : memref<2x64x32xf32, #tpu.memory_space<vmem>>, vector<1x64x32xf32>
    %245 = vector.shape_cast %244 : vector<1x64x32xf32> to vector<64x32xf32>
    %cst_117 = arith.constant dense<0.000000e+00> : vector<16x32xf32>
    %246 = tpu.matmul %243, %245, %cst_117 {dimension_numbers = #tpu.dot_dimension_numbers<[1], [0], [0], [1], [0, 0, 1, 1], [], []>} : vector<16x64xf32>, vector<64x32xf32>, vector<16x32xf32> -> vector<16x32xf32>
    %c1_118 = arith.constant 1 : index
    %c0_119 = arith.constant 0 : index
    %c0_120 = arith.constant 0 : index
    %247 = vector.load %arg10[%c1_118, %c0_119, %c0_120] : memref<2x1x32xf32, #tpu.memory_space<vmem>>, vector<1x1x32xf32>
    %248 = vector.shape_cast %247 : vector<1x1x32xf32> to vector<1x32xf32>
    %249 = vector.broadcast %248 : vector<1x32xf32> to vector<16x32xf32>
    %250 = arith.addf %246, %249 : vector<16x32xf32>
    %251 = arith.addf %234, %250 : vector<16x32xf32>
    %c1_121 = arith.constant 1 : index
    %c1_122 = arith.constant 1 : index
    %252 = memref.load %arg11[%c1_121, %c1_122] : memref<2x2xf32, #tpu.memory_space<smem>>
    %253 = arith.mulf %251, %251 : vector<16x32xf32>
    %cst_123 = arith.constant dense<0.000000e+00> : vector<16xf32>
    %254 = vector.multi_reduction <add>, %253, %cst_123 [1] : vector<16x32xf32> to vector<16xf32>
    %255 = vector.shape_cast %254 : vector<16xf32> to vector<16x1xf32>
    %cst_124 = arith.constant 1.000000e-10 : f32
    %256 = vector.broadcast %cst_124 : f32 to vector<16x1xf32>
    %257 = arith.maximumf %255, %256 : vector<16x1xf32>
    %258 = math.rsqrt %257 : vector<16x1xf32>
    %259 = vector.broadcast %252 : f32 to vector<16x1xf32>
    %260 = arith.mulf %259, %258 : vector<16x1xf32>
    %261 = vector.broadcast %260 : vector<16x1xf32> to vector<16x32xf32>
    %262 = arith.mulf %251, %261 : vector<16x32xf32>
    %c0_125 = arith.constant 0 : index
    %c0_126 = arith.constant 0 : index
    %263 = vector.load %arg12[%c0_125, %c0_126] : memref<16x32xf32, #tpu.memory_space<vmem>>, vector<16x32xf32>
    tpu.vector_store %arg12[%c0_125, %c0_126], %262 {strides = array<i32>} : memref<16x32xf32, #tpu.memory_space<vmem>>, vector<16x32xf32>,
    return
  }
  func.func @transform_0(%arg0: i32) -> (i32, i32) {
    %c0_i32 = arith.constant 0 : i32
    %c0_i32_0 = arith.constant 0 : i32
    %c0_i32_1 = arith.constant 0 : i32
    return %c0_i32, %c0_i32_0 : i32, i32
  }
  func.func @transform_1(%arg0: i32) -> (i32, i32) {
    %c0_i32 = arith.constant 0 : i32
    %c0_i32_0 = arith.constant 0 : i32
    %c0_i32_1 = arith.constant 0 : i32
    return %c0_i32, %c0_i32_0 : i32, i32
  }
  func.func @transform_2(%arg0: i32) -> (i32, i32, i32) {
    %c0_i32 = arith.constant 0 : i32
    %c0_i32_0 = arith.constant 0 : i32
    %c0_i32_1 = arith.constant 0 : i32
    %c0_i32_2 = arith.constant 0 : i32
    return %c0_i32, %c0_i32_0, %c0_i32_1 : i32, i32, i32
  }
  func.func @transform_3(%arg0: i32) -> (i32, i32, i32) {
    %c0_i32 = arith.constant 0 : i32
    %c0_i32_0 = arith.constant 0 : i32
    %c0_i32_1 = arith.constant 0 : i32
    %c0_i32_2 = arith.constant 0 : i32
    return %c0_i32, %c0_i32_0, %c0_i32_1 : i32, i32, i32
  }
  func.func @transform_4(%arg0: i32) -> (i32, i32, i32) {
    %c0_i32 = arith.constant 0 : i32
    %c0_i32_0 = arith.constant 0 : i32
    %c0_i32_1 = arith.constant 0 : i32
    %c0_i32_2 = arith.constant 0 : i32
    return %c0_i32, %c0_i32_0, %c0_i32_1 : i32, i32, i32
  }
  func.func @transform_5(%arg0: i32) -> (i32, i32, i32) {
    %c0_i32 = arith.constant 0 : i32
    %c0_i32_0 = arith.constant 0 : i32
    %c0_i32_1 = arith.constant 0 : i32
    %c0_i32_2 = arith.constant 0 : i32
    return %c0_i32, %c0_i32_0, %c0_i32_1 : i32, i32, i32
  }
  func.func @transform_6(%arg0: i32) -> (i32, i32, i32) {
    %c0_i32 = arith.constant 0 : i32
    %c0_i32_0 = arith.constant 0 : i32
    %c0_i32_1 = arith.constant 0 : i32
    %c0_i32_2 = arith.constant 0 : i32
    return %c0_i32, %c0_i32_0, %c0_i32_1 : i32, i32, i32
  }
  func.func @transform_7(%arg0: i32) -> (i32, i32, i32) {
    %c0_i32 = arith.constant 0 : i32
    %c0_i32_0 = arith.constant 0 : i32
    %c0_i32_1 = arith.constant 0 : i32
    %c0_i32_2 = arith.constant 0 : i32
    return %c0_i32, %c0_i32_0, %c0_i32_1 : i32, i32, i32
  }
  func.func @transform_8(%arg0: i32) -> (i32, i32, i32) {
    %c0_i32 = arith.constant 0 : i32
    %c0_i32_0 = arith.constant 0 : i32
    %c0_i32_1 = arith.constant 0 : i32
    %c0_i32_2 = arith.constant 0 : i32
    return %c0_i32, %c0_i32_0, %c0_i32_1 : i32, i32, i32
  }
  func.func @transform_9(%arg0: i32) -> (i32, i32, i32) {
    %c0_i32 = arith.constant 0 : i32
    %c0_i32_0 = arith.constant 0 : i32
    %c0_i32_1 = arith.constant 0 : i32
    %c0_i32_2 = arith.constant 0 : i32
    return %c0_i32, %c0_i32_0, %c0_i32_1 : i32, i32, i32
  }
  func.func @transform_10(%arg0: i32) -> (i32, i32) {
    %c0_i32 = arith.constant 0 : i32
    %c0_i32_0 = arith.constant 0 : i32
    %c0_i32_1 = arith.constant 0 : i32
    return %c0_i32, %c0_i32_0 : i32, i32
  }
  func.func @transform_11(%arg0: i32) -> (i32, i32) {
    %c0_i32 = arith.constant 0 : i32
    %c0_i32_0 = arith.constant 0 : i32
    %c0_i32_1 = arith.constant 0 : i32
    return %c0_i32, %c0_i32_0 : i32, i32
  }
}

</mosaic_0001>

<llo_original>
// kernel: encoder_forward.1
$region0: #{encoder_forward.1}
  #allocation0 [shape = 'u32[]', space=smem, size = 0x4, offset = 0x4, fixed_abs, tag = 'smem constant byte address 0x4 - core index']
  #allocation1 [shape = 'u32[72,128]{1,0:T(1,128)}', space=vmem, size = 0x9000, scoped, tag = 'internal scratch']
  #allocation2 [shape = 'f32[16,32]{1,0:T(8,128)}', space=vmem, size = 0x2000, scoped, tag = 'scratch operand']
  %s0 = inlined_call_operand.vmem [shape: f32[2,8], index: 0, kind: input, shape index: {}]
  %s1 = inlined_call_operand.hbm [shape: f32[16,32], index: 1, kind: input, shape index: {}]
  %s2 = inlined_call_operand.vmem [shape: f32[2,32,96], index: 2, kind: input, shape index: {}]
  %s3 = inlined_call_operand.vmem [shape: f32[2,1,96], index: 3, kind: input, shape index: {}]
  %s4 = inlined_call_operand.vmem [shape: f32[2,32,32], index: 4, kind: input, shape index: {}]
  %s5 = inlined_call_operand.hbm [shape: f32[2,1,32], index: 5, kind: input, shape index: {}]
  %s6 = inlined_call_operand.vmem [shape: f32[2,32,64], index: 6, kind: input, shape index: {}]
  %s7 = inlined_call_operand.hbm [shape: f32[2,1,64], index: 7, kind: input, shape index: {}]
  %s8 = inlined_call_operand.vmem [shape: f32[2,64,32], index: 8, kind: input, shape index: {}]
  %s9 = inlined_call_operand.hbm [shape: f32[2,1,32], index: 9, kind: input, shape index: {}]
  %s10 = inlined_call_operand.hbm [shape: f32[2,2], index: 10, kind: input, shape index: {}]
  %s11 = inlined_call_operand.hbm [shape: f32[16,32], index: 11, kind: output, shape index: {}]
  %s12 = sld [smem:[#allocation0]]
  $region74: #{encoder_forward.1} parent=0
    _
  %s14 = ssub.s32 1, %s12
  %s15 = scalar_select 0, %s14, %s12
  $region1: #{encoder_forward.1} parent=0
    #allocation3 [shape = 'u8[8192]{0}', space=vmem, size = 0x2000, scoped, tag = 'input window, operand 1, single buffered']
    #allocation4 [shape = 's32[1]{0}', space=sflag, size = 0x4, scoped, tag = 'scoped memory for encoder_forward.1']
    #allocation5 [shape = 's32[1]{0}', space=sflag, size = 0x4, scoped, tag = 'scoped memory for encoder_forward.1']
    #allocation6 [shape = 's32[1]{0}', space=sflag, size = 0x4, scoped, tag = 'scoped memory for encoder_forward.1']
    #allocation7 [shape = 'u8[1024]{0}', space=vmem, size = 0x400, scoped, tag = 'input window, operand 5, single buffered']
    #allocation8 [shape = 's32[1]{0}', space=sflag, size = 0x4, scoped, tag = 'scoped memory for encoder_forward.1']
    #allocation9 [shape = 'u8[1024]{0}', space=vmem, size = 0x400, scoped, tag = 'input window, operand 7, single buffered']
    #allocation10 [shape = 'u8[1024]{0}', space=vmem, size = 0x400, scoped, tag = 'input window, operand 9, single buffered']
    #allocation11 [shape = 's32[1]{0}', space=sflag, size = 0x4, scoped, tag = 'scoped memory for encoder_forward.1']
    #allocation12 [shape = 'u8[1024]{0}', space=smem, size = 0x400, scoped, tag = 'input window, operand 10, single buffered']
    #allocation13 [shape = 'u8[8192]{0}', space=vmem, size = 0x2000, scoped, tag = 'output window, operand 0, single buffered']
    %16 = vsyncpa [#allocation4], 0
    %17 = vsyncpa [#allocation8], 0
    %18 = vsyncpa [#allocation11], 0
    %19 = vsyncpa [#allocation6], 0
    %20 = vsyncpa [#allocation5], 0
    // Predicated region
    $region2: #{encoder_forward.1} parent=1 // pred_check
      _
    $region3: #{encoder_forward.1} parent=1 // pred_check_branch
      %22 = sbr.rel (0) target = $region5
    $region4: #{encoder_forward.1} parent=1 // pred_region
      _
    $region5: #{encoder_forward.1} parent=1 // pred_fallthru
      _
    // Predicated region
    $region6: #{encoder_forward.1} parent=1 // pred_check
      _
    $region7: #{encoder_forward.1} parent=1 // pred_check_branch
      %24 = sbr.rel (0) target = $region9
    $region8: #{encoder_forward.1} parent=1 // pred_region
      %26 = vsyncadd [#allocation4], 0
      %s27 = sshll.u32 %s1, 4
      %s28 = int_to_ptr.hbm [resolvable:$true] %s27
      %s29 = sshll.u32 [#allocation3], 4
      %s30 = int_to_ptr.vmem [resolvable:$true] %s29
      %35 = dma.hbm_to_vmem [thread:$0]  %s28, 256, %s30, [#allocation4], 128, 128, 8
    $region9: #{encoder_forward.1} parent=1 // pred_fallthru
      _
    // Predicated region
    $region10: #{encoder_forward.1} parent=1 // pred_check
      _
    $region11: #{encoder_forward.1} parent=1 // pred_check_branch
      %37 = sbr.rel (0) target = $region13
    $region12: #{encoder_forward.1} parent=1 // pred_region
      _
    $region13: #{encoder_forward.1} parent=1 // pred_fallthru
      _
    // Predicated region
    $region14: #{encoder_forward.1} parent=1 // pred_check
      _
    $region15: #{encoder_forward.1} parent=1 // pred_check_branch
      %39 = sbr.rel (0) target = $region17
    $region16: #{encoder_forward.1} parent=1 // pred_region
      _
    $region17: #{encoder_forward.1} parent=1 // pred_fallthru
      _
    // Predicated region
    $region18: #{encoder_forward.1} parent=1 // pred_check
      _
    $region19: #{encoder_forward.1} parent=1 // pred_check_branch
      %41 = sbr.rel (0) target = $region21
    $region20: #{encoder_forward.1} parent=1 // pred_region
      _
    $region21: #{encoder_forward.1} parent=1 // pred_fallthru
      _
    // Predicated region
    $region22: #{encoder_forward.1} parent=1 // pred_check
      _
    $region23: #{encoder_forward.1} parent=1 // pred_check_branch
      %43 = sbr.rel (0) target = $region25
    $region24: #{encoder_forward.1} parent=1 // pred_region
      %45 = vsyncadd [#allocation8], 0
      %s46 = sshll.u32 %s5, 4
      %s47 = int_to_ptr.hbm [resolvable:$true] %s46
      %s48 = sshll.u32 [#allocation7], 4
      %s49 = int_to_ptr.vmem [resolvable:$true] %s48
      %54 = dma.hbm_to_vmem [thread:$0]  %s47, 32, %s49, [#allocation8], 16, 16, 1
    $region25: #{encoder_forward.1} parent=1 // pred_fallthru
      _
    // Predicated region
    $region26: #{encoder_forward.1} parent=1 // pred_check
      _
    $region27: #{encoder_forward.1} parent=1 // pred_check_branch
      %56 = sbr.rel (0) target = $region29
    $region28: #{encoder_forward.1} parent=1 // pred_region
      _
    $region29: #{encoder_forward.1} parent=1 // pred_fallthru
      _
    // Predicated region
    $region30: #{encoder_forward.1} parent=1 // pred_check
      _
    $region31: #{encoder_forward.1} parent=1 // pred_check_branch
      %58 = sbr.rel (0) target = $region33
    $region32: #{encoder_forward.1} parent=1 // pred_region
      %60 = vsyncadd [#allocation8], 0
      %s61 = sshll.u32 %s7, 4
      %s62 = int_to_ptr.hbm [resolvable:$true] %s61
      %s63 = sshll.u32 [#allocation9], 4
      %s64 = int_to_ptr.vmem [resolvable:$true] %s63
      %69 = dma.hbm_to_vmem [thread:$0]  %s62, 32, %s64, [#allocation8], 16, 16, 1
    $region33: #{encoder_forward.1} parent=1 // pred_fallthru
      _
    // Predicated region
    $region34: #{encoder_forward.1} parent=1 // pred_check
      _
    $region35: #{encoder_forward.1} parent=1 // pred_check_branch
      %71 = sbr.rel (0) target = $region37
    $region36: #{encoder_forward.1} parent=1 // pred_region
      _
    $region37: #{encoder_forward.1} parent=1 // pred_fallthru
      _
    // Predicated region
    $region38: #{encoder_forward.1} parent=1 // pred_check
      _
    $region39: #{encoder_forward.1} parent=1 // pred_check_branch
      %73 = sbr.rel (0) target = $region41
    $region40: #{encoder_forward.1} parent=1 // pred_region
      %75 = vsyncadd [#allocation11], 0
      %s76 = sshll.u32 %s9, 4
      %s77 = int_to_ptr.hbm [resolvable:$true] %s76
      %s78 = sshll.u32 [#allocation10], 4
      %s79 = int_to_ptr.vmem [resolvable:$true] %s78
      %84 = dma.hbm_to_vmem [thread:$0]  %s77, 32, %s79, [#allocation11], 16, 16, 1
    $region41: #{encoder_forward.1} parent=1 // pred_fallthru
      _
    // Predicated region
    $region42: #{encoder_forward.1} parent=1 // pred_check
      _
    $region43: #{encoder_forward.1} parent=1 // pred_check_branch
      %86 = sbr.rel (0) target = $region45
    $region44: #{encoder_forward.1} parent=1 // pred_region
      %88 = vsyncadd [#allocation6], 0
      %s90 = sshll.u32 %s10, 4
      %s91 = int_to_ptr.hbm [resolvable:$true] %s90
      %93 = dma.hbm_to_smem %s91, 32, [#allocation12], [#allocation6]
    $region45: #{encoder_forward.1} parent=1 // pred_fallthru
      _
    // Predicated region
    $region46: #{encoder_forward.1} parent=1 // pred_check
      _
    $region47: #{encoder_forward.1} parent=1 // pred_check_branch
      %95 = sbr.rel (0) target = $region49
    $region48: #{encoder_forward.1} parent=1 // pred_region
      %97 = dma.done [#allocation4], 256
    $region49: #{encoder_forward.1} parent=1 // pred_fallthru
      _
    // Predicated region
    $region50: #{encoder_forward.1} parent=1 // pred_check
      _
    $region51: #{encoder_forward.1} parent=1 // pred_check_branch
      %99 = sbr.rel (0) target = $region53
    $region52: #{encoder_forward.1} parent=1 // pred_region
      %101 = dma.done [#allocation8], 32
    $region53: #{encoder_forward.1} parent=1 // pred_fallthru
      _
    // Predicated region
    $region54: #{encoder_forward.1} parent=1 // pred_check
      _
    $region55: #{encoder_forward.1} parent=1 // pred_check_branch
      %103 = sbr.rel (0) target = $region57
    $region56: #{encoder_forward.1} parent=1 // pred_region
      %105 = dma.done [#allocation8], 32
    $region57: #{encoder_forward.1} parent=1 // pred_fallthru
      _
    // Predicated region
    $region58: #{encoder_forward.1} parent=1 // pred_check
      _
    $region59: #{encoder_forward.1} parent=1 // pred_check_branch
      %107 = sbr.rel (0) target = $region61
    $region60: #{encoder_forward.1} parent=1 // pred_region
      %109 = dma.done [#allocation11], 32
    $region61: #{encoder_forward.1} parent=1 // pred_fallthru
      _
    // Predicated region
    $region62: #{encoder_forward.1} parent=1 // pred_check
      _
    $region63: #{encoder_forward.1} parent=1 // pred_check_branch
      %111 = sbr.rel (0) target = $region65
    $region64: #{encoder_forward.1} parent=1 // pred_region
      %113 = dma.done [#allocation6], 32
    $region65: #{encoder_forward.1} parent=1 // pred_fallthru
      _
    %114 = sfence
    %v115 = vld [vmem:[#allocation3] sm:$0xff]
    %v116 = vld [vmem:[#allocation3 + $0x8] sm:$0xff]
    %v117 = vld [vmem:[%s0] sm:$0x3]
    %v118 = vmul.f32 %v117, -1e+09
    %v120 = vrot.slane %v118, 1
    %v121 = vperm.slane %v118, 0
    %v122 = vperm.slane %v120, 0
    %v125 = vld [vmem:[%s2] sm:$0xff]
    %v126 = vld [vmem:[%s2 + $0x8] sm:$0xff]
    %v127 = vld [vmem:[%s2 + $0x10] sm:$0xff]
    %v128 = vld [vmem:[%s2 + $0x18] sm:$0xff]
    %v129 = vld [vmem:[%s3] sm:$0x1]
    %v131 = vperm.slane %v129, 0
    %vm133 = vcmask 261120
    %v135 = vsel %vm133, %v115, 0
    %v138 = vsel %vm133, %v116, 0
    %140 = vmatpush.msra.mxu0 0.0
    %141 = vmatpush.msra.mxu0 0.0
    %142 = vmatpush.msra.mxu0 0.0
    %143 = vmatpush.msra.mxu0 0.0
    %144 = vmatpush.msra.mxu0 0.0
    %145 = vmatpush.msra.mxu0 0.0
    %146 = vmatpush.msra.mxu0 0.0
    %147 = vmatpush.msra.mxu0 0.0
    %148 = vmatpush.msra.mxu0 0.0
    %149 = vmatpush.msra.mxu0 0.0
    %150 = vmatpush.msra.mxu0 0.0
    %151 = vmatpush.msra.mxu0 0.0
    %152 = vmatpush.msra.mxu0 %v128
    %153 = vmatpush.msra.mxu0 %v127
    %154 = vmatpush.msra.mxu0 %v126
    %155 = vmatpush.msra.mxu0 %v125
    %156 = vmatmul.f32.gmra.mxu0 %v135
    %v157 = vpop.f32.mrf.mxu0
    %v158 = vadd.f32 %v131, %v157
    %159 = vmatmul.f32.gmra.mxu0 %v138
    %v160 = vpop.f32.mrf.mxu0
    %v161 = vadd.f32 %v131, %v160
    %162 = vdwg.mxu0
    %164 = vrot.lane.b32.xlu0 %v158, 96
    %v165 = vpop.permute.xlu0 %164
    %vm166 = vcmask 64512
    %v167 = vsel %vm166, %v158, 0
    %v169 = vsel %vm166, %v165, 0
    %171 = vmatpush.xpose.msra.mxu0 0.0
    %172 = vmatpush.xpose.msra.mxu0 0.0
    %173 = vmatpush.xpose.msra.mxu0 0.0
    %174 = vmatpush.xpose.msra.mxu0 0.0
    %175 = vmatpush.xpose.msra.mxu0 0.0
    %176 = vmatpush.xpose.msra.mxu0 0.0
    %177 = vmatpush.xpose.msra.mxu0 0.0
    %178 = vmatpush.xpose.msra.mxu0 0.0
    %179 = vmatpush.xpose.msra.mxu0 0.0
    %180 = vmatpush.xpose.msra.mxu0 0.0
    %181 = vmatpush.xpose.msra.mxu0 0.0
    %182 = vmatpush.xpose.msra.mxu0 0.0
    %183 = vmatpush.xpose.msra.mxu0 0.0
    %184 = vmatpush.xpose.msra.mxu0 0.0
    %185 = vmatpush.xpose.msra.mxu0 0.0
    %186 = vmatpush.xpose.msra.mxu0 %v169
    %187 = vmatmul.f32.gmra.mxu0 %v167
    %v188 = vpop.f32.mrf.mxu0
    %v189 = vadd.f32 %v121, %v188
    %190 = vdwg.mxu0
    %192 = vrot.lane.b32.xlu0 %v161, 96
    %v193 = vpop.permute.xlu0 %192
    %v194 = vsel %vm166, %v161, 0
    %v196 = vsel %vm166, %v193, 0
    %198 = vmatpush.xpose.msra.mxu0 0.0
    %199 = vmatpush.xpose.msra.mxu0 0.0
    %200 = vmatpush.xpose.msra.mxu0 0.0
    %201 = vmatpush.xpose.msra.mxu0 0.0
    %202 = vmatpush.xpose.msra.mxu0 0.0
    %203 = vmatpush.xpose.msra.mxu0 0.0
    %204 = vmatpush.xpose.msra.mxu0 0.0
    %205 = vmatpush.xpose.msra.mxu0 0.0
    %206 = vmatpush.xpose.msra.mxu0 0.0
    %207 = vmatpush.xpose.msra.mxu0 0.0
    %208 = vmatpush.xpose.msra.mxu0 0.0
    %209 = vmatpush.xpose.msra.mxu0 0.0
    %210 = vmatpush.xpose.msra.mxu0 0.0
    %211 = vmatpush.xpose.msra.mxu0 0.0
    %212 = vmatpush.xpose.msra.mxu0 0.0
    %213 = vmatpush.xpose.msra.mxu0 %v196
    %214 = vmatmul.f32.gmra.mxu0 %v194
    %v215 = vpop.f32.mrf.mxu0
    %v216 = vadd.f32 %v122, %v215
    %217 = vdwg.mxu0
    %v218 = vsel %vm166, %v189, -inf
    %219 = vmax.xlane.f32.xlu0 %v218
    %v220 = vpop.xlane.xlu0 %219
    %v221 = vsel %vm166, %v216, -inf
    %222 = vmax.xlane.f32.xlu0 %v221
    %v223 = vpop.xlane.xlu0 %222
    %v224 = vsub.f32 %v189, %v220
    %v225 = vsub.f32 %v216, %v223
    %v226 = vmul.f32 %v224, 1.442695
    %v227 = vpow.pop %v226
    %v228 = vmul.f32 %v225, 1.442695
    %v229 = vpow.pop %v228
    %v230 = vsel %vm166, %v227, 0.0
    %231 = vadd.xlane.f32.xlu0 %v230
    %v232 = vpop.xlane.xlu0 %231
    %v233 = vsel %vm166, %v229, 0.0
    %234 = vadd.xlane.f32.xlu0 %v233
    %v235 = vpop.xlane.xlu0 %234
    %v236 = vrcp.pop %v232
    %v237 = vrcp.pop %v235
    %v238 = vmul.f32 %v227, %v236
    %v239 = vmul.f32 %v229, %v237
    %240 = vrot.lane.b32.xlu0 %v158, 64
    %v241 = vpop.permute.xlu0 %240
    %v244 = vsel %vm166, %v238, 0
    %246 = vmatpush.msra.mxu0 0.0
    %247 = vmatpush.msra.mxu0 0.0
    %248 = vmatpush.msra.mxu0 0.0
    %249 = vmatpush.msra.mxu0 0.0
    %250 = vmatpush.msra.mxu0 0.0
    %251 = vmatpush.msra.mxu0 0.0
    %252 = vmatpush.msra.mxu0 0.0
    %253 = vmatpush.msra.mxu0 0.0
    %254 = vmatpush.msra.mxu0 0.0
    %255 = vmatpush.msra.mxu0 0.0
    %256 = vmatpush.msra.mxu0 0.0
    %257 = vmatpush.msra.mxu0 0.0
    %258 = vmatpush.msra.mxu0 0.0
    %259 = vmatpush.msra.mxu0 0.0
    %260 = vmatpush.msra.mxu0 0.0
    %261 = vmatpush.msra.mxu0 %v241
    %262 = vmatmul.f32.gmra.mxu0 %v244
    %v263 = vpop.f32.mrf.mxu0
    %v264 = vadd.f32 0.0, %v263
    %265 = vdwg.mxu0
    %266 = vrot.lane.b32.xlu0 %v161, 64
    %v267 = vpop.permute.xlu0 %266
    %v270 = vsel %vm166, %v239, 0
    %272 = vmatpush.msra.mxu0 0.0
    %273 = vmatpush.msra.mxu0 0.0
    %274 = vmatpush.msra.mxu0 0.0
    %275 = vmatpush.msra.mxu0 0.0
    %276 = vmatpush.msra.mxu0 0.0
    %277 = vmatpush.msra.mxu0 0.0
    %278 = vmatpush.msra.mxu0 0.0
    %279 = vmatpush.msra.mxu0 0.0
    %280 = vmatpush.msra.mxu0 0.0
    %281 = vmatpush.msra.mxu0 0.0
    %282 = vmatpush.msra.mxu0 0.0
    %283 = vmatpush.msra.mxu0 0.0
    %284 = vmatpush.msra.mxu0 0.0
    %285 = vmatpush.msra.mxu0 0.0
    %286 = vmatpush.msra.mxu0 0.0
    %287 = vmatpush.msra.mxu0 %v267
    %288 = vmatmul.f32.gmra.mxu0 %v270
    %v289 = vpop.f32.mrf.mxu0
    %v290 = vadd.f32 0.0, %v289
    %291 = vdwg.mxu0
    %292 = vst.msk [vmem:[#allocation2] sm:$0xff] %vm166, %v264
    %293 = vst.msk [vmem:[#allocation2 + $0x8] sm:$0xff] %vm166, %v290
    %294 = vrot.lane.b32.xlu0 %v158, 120
    %v295 = vpop.permute.xlu0 %294
    %296 = vrot.lane.b32.xlu0 %v158, 88
    %v297 = vpop.permute.xlu0 %296
    %v298 = vsel %vm166, %v295, 0
    %v300 = vsel %vm166, %v297, 0
    %302 = vmatpush.xpose.msra.mxu0 0.0
    %303 = vmatpush.xpose.msra.mxu0 0.0
    %304 = vmatpush.xpose.msra.mxu0 0.0
    %305 = vmatpush.xpose.msra.mxu0 0.0
    %306 = vmatpush.xpose.msra.mxu0 0.0
    %307 = vmatpush.xpose.msra.mxu0 0.0
    %308 = vmatpush.xpose.msra.mxu0 0.0
    %309 = vmatpush.xpose.msra.mxu0 0.0
    %310 = vmatpush.xpose.msra.mxu0 0.0
    %311 = vmatpush.xpose.msra.mxu0 0.0
    %312 = vmatpush.xpose.msra.mxu0 0.0
    %313 = vmatpush.xpose.msra.mxu0 0.0
    %314 = vmatpush.xpose.msra.mxu0 0.0
    %315 = vmatpush.xpose.msra.mxu0 0.0
    %316 = vmatpush.xpose.msra.mxu0 0.0
    %317 = vmatpush.xpose.msra.mxu0 %v300
    %318 = vmatmul.f32.gmra.mxu0 %v298
    %v319 = vpop.f32.mrf.mxu0
    %v320 = vadd.f32 %v121, %v319
    %321 = vdwg.mxu0
    %322 = vrot.lane.b32.xlu0 %v161, 120
    %v323 = vpop.permute.xlu0 %322
    %324 = vrot.lane.b32.xlu0 %v161, 88
    %v325 = vpop.permute.xlu0 %324
    %v326 = vsel %vm166, %v323, 0
    %v328 = vsel %vm166, %v325, 0
    %330 = vmatpush.xpose.msra.mxu0 0.0
    %331 = vmatpush.xpose.msra.mxu0 0.0
    %332 = vmatpush.xpose.msra.mxu0 0.0
    %333 = vmatpush.xpose.msra.mxu0 0.0
    %334 = vmatpush.xpose.msra.mxu0 0.0
    %335 = vmatpush.xpose.msra.mxu0 0.0
    %336 = vmatpush.xpose.msra.mxu0 0.0
    %337 = vmatpush.xpose.msra.mxu0 0.0
    %338 = vmatpush.xpose.msra.mxu0 0.0
    %339 = vmatpush.xpose.msra.mxu0 0.0
    %340 = vmatpush.xpose.msra.mxu0 0.0
    %341 = vmatpush.xpose.msra.mxu0 0.0
    %342 = vmatpush.xpose.msra.mxu0 0.0
    %343 = vmatpush.xpose.msra.mxu0 0.0
    %344 = vmatpush.xpose.msra.mxu0 0.0
    %345 = vmatpush.xpose.msra.mxu0 %v328
    %346 = vmatmul.f32.gmra.mxu0 %v326
    %v347 = vpop.f32.mrf.mxu0
    %v348 = vadd.f32 %v122, %v347
    %349 = vdwg.mxu0
    %v350 = vsel %vm166, %v320, -inf
    %351 = vmax.xlane.f32.xlu0 %v350
    %v352 = vpop.xlane.xlu0 %351
    %v353 = vsel %vm166, %v348, -inf
    %354 = vmax.xlane.f32.xlu0 %v353
    %v355 = vpop.xlane.xlu0 %354
    %v356 = vsub.f32 %v320, %v352
    %v357 = vsub.f32 %v348, %v355
    %v358 = vmul.f32 %v356, 1.442695
    %v359 = vpow.pop %v358
    %v360 = vmul.f32 %v357, 1.442695
    %v361 = vpow.pop %v360
    %v362 = vsel %vm166, %v359, 0.0
    %363 = vadd.xlane.f32.xlu0 %v362
    %v364 = vpop.xlane.xlu0 %363
    %v365 = vsel %vm166, %v361, 0.0
    %366 = vadd.xlane.f32.xlu0 %v365
    %v367 = vpop.xlane.xlu0 %366
    %v368 = vrcp.pop %v364
    %v369 = vrcp.pop %v367
    %v370 = vmul.f32 %v359, %v368
    %v371 = vmul.f32 %v361, %v369
    %372 = vrot.lane.b32.xlu0 %v158, 56
    %v373 = vpop.permute.xlu0 %372
    %v376 = vsel %vm166, %v370, 0
    %378 = vmatpush.msra.mxu0 0.0
    %379 = vmatpush.msra.mxu0 0.0
    %380 = vmatpush.msra.mxu0 0.0
    %381 = vmatpush.msra.mxu0 0.0
    %382 = vmatpush.msra.mxu0 0.0
    %383 = vmatpush.msra.mxu0 0.0
    %384 = vmatpush.msra.mxu0 0.0
    %385 = vmatpush.msra.mxu0 0.0
    %386 = vmatpush.msra.mxu0 0.0
    %387 = vmatpush.msra.mxu0 0.0
    %388 = vmatpush.msra.mxu0 0.0
    %389 = vmatpush.msra.mxu0 0.0
    %390 = vmatpush.msra.mxu0 0.0
    %391 = vmatpush.msra.mxu0 0.0
    %392 = vmatpush.msra.mxu0 0.0
    %393 = vmatpush.msra.mxu0 %v373
    %394 = vmatmul.f32.gmra.mxu0 %v376
    %v395 = vpop.f32.mrf.mxu0
    %v396 = vadd.f32 0.0, %v395
    %397 = vdwg.mxu0
    %398 = vrot.lane.b32.xlu0 %v161, 56
    %v399 = vpop.permute.xlu0 %398
    %v402 = vsel %vm166, %v371, 0
    %404 = vmatpush.msra.mxu0 0.0
    %405 = vmatpush.msra.mxu0 0.0
    %406 = vmatpush.msra.mxu0 0.0
    %407 = vmatpush.msra.mxu0 0.0
    %408 = vmatpush.msra.mxu0 0.0
    %409 = vmatpush.msra.mxu0 0.0
    %410 = vmatpush.msra.mxu0 0.0
    %411 = vmatpush.msra.mxu0 0.0
    %412 = vmatpush.msra.mxu0 0.0
    %413 = vmatpush.msra.mxu0 0.0
    %414 = vmatpush.msra.mxu0 0.0
    %415 = vmatpush.msra.mxu0 0.0
    %416 = vmatpush.msra.mxu0 0.0
    %417 = vmatpush.msra.mxu0 0.0
    %418 = vmatpush.msra.mxu0 0.0
    %419 = vmatpush.msra.mxu0 %v399
    %420 = vmatmul.f32.gmra.mxu0 %v402
    %v421 = vpop.f32.mrf.mxu0
    %v422 = vadd.f32 0.0, %v421
    %423 = vdwg.mxu0
    %426 = vrot.lane.b32.xlu0 %v396, 8
    %v427 = vpop.permute.xlu0 %426
    %428 = vrot.lane.b32.xlu0 %v422, 8
    %v429 = vpop.permute.xlu0 %428
    %vm432 = vcmask 130112
    %433 = vst.msk [vmem:[#allocation2] sm:$0xff] %vm432, %v427
    %434 = vst.msk [vmem:[#allocation2 + $0x8] sm:$0xff] %vm432, %v429
    %435 = vrot.lane.b32.xlu0 %v158, 112
    %v436 = vpop.permute.xlu0 %435
    %437 = vrot.lane.b32.xlu0 %v158, 80
    %v438 = vpop.permute.xlu0 %437
    %v439 = vsel %vm166, %v436, 0
    %v441 = vsel %vm166, %v438, 0
    %443 = vmatpush.xpose.msra.mxu0 0.0
    %444 = vmatpush.xpose.msra.mxu0 0.0
    %445 = vmatpush.xpose.msra.mxu0 0.0
    %446 = vmatpush.xpose.msra.mxu0 0.0
    %447 = vmatpush.xpose.msra.mxu0 0.0
    %448 = vmatpush.xpose.msra.mxu0 0.0
    %449 = vmatpush.xpose.msra.mxu0 0.0
    %450 = vmatpush.xpose.msra.mxu0 0.0
    %451 = vmatpush.xpose.msra.mxu0 0.0
    %452 = vmatpush.xpose.msra.mxu0 0.0
    %453 = vmatpush.xpose.msra.mxu0 0.0
    %454 = vmatpush.xpose.msra.mxu0 0.0
    %455 = vmatpush.xpose.msra.mxu0 0.0
    %456 = vmatpush.xpose.msra.mxu0 0.0
    %457 = vmatpush.xpose.msra.mxu0 0.0
    %458 = vmatpush.xpose.msra.mxu0 %v441
    %459 = vmatmul.f32.gmra.mxu0 %v439
    %v460 = vpop.f32.mrf.mxu0
    %v461 = vadd.f32 %v121, %v460
    %462 = vdwg.mxu0
    %463 = vrot.lane.b32.xlu0 %v161, 112
    %v464 = vpop.permute.xlu0 %463
    %465 = vrot.lane.b32.xlu0 %v161, 80
    %v466 = vpop.permute.xlu0 %465
    %v467 = vsel %vm166, %v464, 0
    %v469 = vsel %vm166, %v466, 0
    %471 = vmatpush.xpose.msra.mxu0 0.0
    %472 = vmatpush.xpose.msra.mxu0 0.0
    %473 = vmatpush.xpose.msra.mxu0 0.0
    %474 = vmatpush.xpose.msra.mxu0 0.0
    %475 = vmatpush.xpose.msra.mxu0 0.0
    %476 = vmatpush.xpose.msra.mxu0 0.0
    %477 = vmatpush.xpose.msra.mxu0 0.0
    %478 = vmatpush.xpose.msra.mxu0 0.0
    %479 = vmatpush.xpose.msra.mxu0 0.0
    %480 = vmatpush.xpose.msra.mxu0 0.0
    %481 = vmatpush.xpose.msra.mxu0 0.0
    %482 = vmatpush.xpose.msra.mxu0 0.0
    %483 = vmatpush.xpose.msra.mxu0 0.0
    %484 = vmatpush.xpose.msra.mxu0 0.0
    %485 = vmatpush.xpose.msra.mxu0 0.0
    %486 = vmatpush.xpose.msra.mxu0 %v469
    %487 = vmatmul.f32.gmra.mxu0 %v467
    %v488 = vpop.f32.mrf.mxu0
    %v489 = vadd.f32 %v122, %v488
    %490 = vdwg.mxu0
    %v491 = vsel %vm166, %v461, -inf
    %492 = vmax.xlane.f32.xlu0 %v491
    %v493 = vpop.xlane.xlu0 %492
    %v494 = vsel %vm166, %v489, -inf
    %495 = vmax.xlane.f32.xlu0 %v494
    %v496 = vpop.xlane.xlu0 %495
    %v497 = vsub.f32 %v461, %v493
    %v498 = vsub.f32 %v489, %v496
    %v499 = vmul.f32 %v497, 1.442695
    %v500 = vpow.pop %v499
    %v501 = vmul.f32 %v498, 1.442695
    %v502 = vpow.pop %v501
    %v503 = vsel %vm166, %v500, 0.0
    %504 = vadd.xlane.f32.xlu0 %v503
    %v505 = vpop.xlane.xlu0 %504
    %v506 = vsel %vm166, %v502, 0.0
    %507 = vadd.xlane.f32.xlu0 %v506
    %v508 = vpop.xlane.xlu0 %507
    %v509 = vrcp.pop %v505
    %v510 = vrcp.pop %v508
    %v511 = vmul.f32 %v500, %v509
    %v512 = vmul.f32 %v502, %v510
    %513 = vrot.lane.b32.xlu0 %v158, 48
    %v514 = vpop.permute.xlu0 %513
    %v517 = vsel %vm166, %v511, 0
    %519 = vmatpush.msra.mxu0 0.0
    %520 = vmatpush.msra.mxu0 0.0
    %521 = vmatpush.msra.mxu0 0.0
    %522 = vmatpush.msra.mxu0 0.0
    %523 = vmatpush.msra.mxu0 0.0
    %524 = vmatpush.msra.mxu0 0.0
    %525 = vmatpush.msra.mxu0 0.0
    %526 = vmatpush.msra.mxu0 0.0
    %527 = vmatpush.msra.mxu0 0.0
    %528 = vmatpush.msra.mxu0 0.0
    %529 = vmatpush.msra.mxu0 0.0
    %530 = vmatpush.msra.mxu0 0.0
    %531 = vmatpush.msra.mxu0 0.0
    %532 = vmatpush.msra.mxu0 0.0
    %533 = vmatpush.msra.mxu0 0.0
    %534 = vmatpush.msra.mxu0 %v514
    %535 = vmatmul.f32.gmra.mxu0 %v517
    %v536 = vpop.f32.mrf.mxu0
    %v537 = vadd.f32 0.0, %v536
    %538 = vdwg.mxu0
    %539 = vrot.lane.b32.xlu0 %v161, 48
    %v540 = vpop.permute.xlu0 %539
    %v543 = vsel %vm166, %v512, 0
    %545 = vmatpush.msra.mxu0 0.0
    %546 = vmatpush.msra.mxu0 0.0
    %547 = vmatpush.msra.mxu0 0.0
    %548 = vmatpush.msra.mxu0 0.0
    %549 = vmatpush.msra.mxu0 0.0
    %550 = vmatpush.msra.mxu0 0.0
    %551 = vmatpush.msra.mxu0 0.0
    %552 = vmatpush.msra.mxu0 0.0
    %553 = vmatpush.msra.mxu0 0.0
    %554 = vmatpush.msra.mxu0 0.0
    %555 = vmatpush.msra.mxu0 0.0
    %556 = vmatpush.msra.mxu0 0.0
    %557 = vmatpush.msra.mxu0 0.0
    %558 = vmatpush.msra.mxu0 0.0
    %559 = vmatpush.msra.mxu0 0.0
    %560 = vmatpush.msra.mxu0 %v540
    %561 = vmatmul.f32.gmra.mxu0 %v543
    %v562 = vpop.f32.mrf.mxu0
    %v563 = vadd.f32 0.0, %v562
    %564 = vdwg.mxu0
    %567 = vrot.lane.b32.xlu0 %v537, 16
    %v568 = vpop.permute.xlu0 %567
    %569 = vrot.lane.b32.xlu0 %v563, 16
    %v570 = vpop.permute.xlu0 %569
    %vm573 = vcmask 195712
    %574 = vst.msk [vmem:[#allocation2] sm:$0xff] %vm573, %v568
    %575 = vst.msk [vmem:[#allocation2 + $0x8] sm:$0xff] %vm573, %v570
    %576 = vrot.lane.b32.xlu0 %v158, 104
    %v577 = vpop.permute.xlu0 %576
    %578 = vrot.lane.b32.xlu0 %v158, 72
    %v579 = vpop.permute.xlu0 %578
    %v580 = vsel %vm166, %v577, 0
    %v582 = vsel %vm166, %v579, 0
    %584 = vmatpush.xpose.msra.mxu0 0.0
    %585 = vmatpush.xpose.msra.mxu0 0.0
    %586 = vmatpush.xpose.msra.mxu0 0.0
    %587 = vmatpush.xpose.msra.mxu0 0.0
    %588 = vmatpush.xpose.msra.mxu0 0.0
    %589 = vmatpush.xpose.msra.mxu0 0.0
    %590 = vmatpush.xpose.msra.mxu0 0.0
    %591 = vmatpush.xpose.msra.mxu0 0.0
    %592 = vmatpush.xpose.msra.mxu0 0.0
    %593 = vmatpush.xpose.msra.mxu0 0.0
    %594 = vmatpush.xpose.msra.mxu0 0.0
    %595 = vmatpush.xpose.msra.mxu0 0.0
    %596 = vmatpush.xpose.msra.mxu0 0.0
    %597 = vmatpush.xpose.msra.mxu0 0.0
    %598 = vmatpush.xpose.msra.mxu0 0.0
    %599 = vmatpush.xpose.msra.mxu0 %v582
    %600 = vmatmul.f32.gmra.mxu0 %v580
    %v601 = vpop.f32.mrf.mxu0
    %v602 = vadd.f32 %v121, %v601
    %603 = vdwg.mxu0
    %604 = vrot.lane.b32.xlu0 %v161, 104
    %v605 = vpop.permute.xlu0 %604
    %606 = vrot.lane.b32.xlu0 %v161, 72
    %v607 = vpop.permute.xlu0 %606
    %v608 = vsel %vm166, %v605, 0
    %v610 = vsel %vm166, %v607, 0
    %612 = vmatpush.xpose.msra.mxu0 0.0
    %613 = vmatpush.xpose.msra.mxu0 0.0
    %614 = vmatpush.xpose.msra.mxu0 0.0
    %615 = vmatpush.xpose.msra.mxu0 0.0
    %616 = vmatpush.xpose.msra.mxu0 0.0
    %617 = vmatpush.xpose.msra.mxu0 0.0
    %618 = vmatpush.xpose.msra.mxu0 0.0
    %619 = vmatpush.xpose.msra.mxu0 0.0
    %620 = vmatpush.xpose.msra.mxu0 0.0
    %621 = vmatpush.xpose.msra.mxu0 0.0
    %622 = vmatpush.xpose.msra.mxu0 0.0
    %623 = vmatpush.xpose.msra.mxu0 0.0
    %624 = vmatpush.xpose.msra.mxu0 0.0
    %625 = vmatpush.xpose.msra.mxu0 0.0
    %626 = vmatpush.xpose.msra.mxu0 0.0
    %627 = vmatpush.xpose.msra.mxu0 %v610
    %628 = vmatmul.f32.gmra.mxu0 %v608
    %v629 = vpop.f32.mrf.mxu0
    %v630 = vadd.f32 %v122, %v629
    %631 = vdwg.mxu0
    %v632 = vsel %vm166, %v602, -inf
    %633 = vmax.xlane.f32.xlu0 %v632
    %v634 = vpop.xlane.xlu0 %633
    %v635 = vsel %vm166, %v630, -inf
    %636 = vmax.xlane.f32.xlu0 %v635
    %v637 = vpop.xlane.xlu0 %636
    %v638 = vsub.f32 %v602, %v634
    %v639 = vsub.f32 %v630, %v637
    %v640 = vmul.f32 %v638, 1.442695
    %v641 = vpow.pop %v640
    %v642 = vmul.f32 %v639, 1.442695
    %v643 = vpow.pop %v642
    %v644 = vsel %vm166, %v641, 0.0
    %645 = vadd.xlane.f32.xlu0 %v644
    %v646 = vpop.xlane.xlu0 %645
    %v647 = vsel %vm166, %v643, 0.0
    %648 = vadd.xlane.f32.xlu0 %v647
    %v649 = vpop.xlane.xlu0 %648
    %v650 = vrcp.pop %v646
    %v651 = vrcp.pop %v649
    %v652 = vmul.f32 %v641, %v650
    %v653 = vmul.f32 %v643, %v651
    %654 = vrot.lane.b32.xlu0 %v158, 40
    %v655 = vpop.permute.xlu0 %654
    %v658 = vsel %vm166, %v652, 0
    %660 = vmatpush.msra.mxu0 0.0
    %661 = vmatpush.msra.mxu0 0.0
    %662 = vmatpush.msra.mxu0 0.0
    %663 = vmatpush.msra.mxu0 0.0
    %664 = vmatpush.msra.mxu0 0.0
    %665 = vmatpush.msra.mxu0 0.0
    %666 = vmatpush.msra.mxu0 0.0
    %667 = vmatpush.msra.mxu0 0.0
    %668 = vmatpush.msra.mxu0 0.0
    %669 = vmatpush.msra.mxu0 0.0
    %670 = vmatpush.msra.mxu0 0.0
    %671 = vmatpush.msra.mxu0 0.0
    %672 = vmatpush.msra.mxu0 0.0
    %673 = vmatpush.msra.mxu0 0.0
    %674 = vmatpush.msra.mxu0 0.0
    %675 = vmatpush.msra.mxu0 %v655
    %676 = vmatmul.f32.gmra.mxu0 %v658
    %v677 = vpop.f32.mrf.mxu0
    %v678 = vadd.f32 0.0, %v677
    %679 = vdwg.mxu0
    %680 = vrot.lane.b32.xlu0 %v161, 40
    %v681 = vpop.permute.xlu0 %680
    %v684 = vsel %vm166, %v653, 0
    %686 = vmatpush.msra.mxu0 0.0
    %687 = vmatpush.msra.mxu0 0.0
    %688 = vmatpush.msra.mxu0 0.0
    %689 = vmatpush.msra.mxu0 0.0
    %690 = vmatpush.msra.mxu0 0.0
    %691 = vmatpush.msra.mxu0 0.0
    %692 = vmatpush.msra.mxu0 0.0
    %693 = vmatpush.msra.mxu0 0.0
    %694 = vmatpush.msra.mxu0 0.0
    %695 = vmatpush.msra.mxu0 0.0
    %696 = vmatpush.msra.mxu0 0.0
    %697 = vmatpush.msra.mxu0 0.0
    %698 = vmatpush.msra.mxu0 0.0
    %699 = vmatpush.msra.mxu0 0.0
    %700 = vmatpush.msra.mxu0 0.0
    %701 = vmatpush.msra.mxu0 %v681
    %702 = vmatmul.f32.gmra.mxu0 %v684
    %v703 = vpop.f32.mrf.mxu0
    %v704 = vadd.f32 0.0, %v703
    %705 = vdwg.mxu0
    %708 = vrot.lane.b32.xlu0 %v678, 24
    %v709 = vpop.permute.xlu0 %708
    %710 = vrot.lane.b32.xlu0 %v704, 24
    %v711 = vpop.permute.xlu0 %710
    %vm714 = vcmask 261312
    %715 = vst.msk [vmem:[#allocation2] sm:$0xff] %vm714, %v709
    %716 = vst.msk [vmem:[#allocation2 + $0x8] sm:$0xff] %vm714, %v711
    %v717 = vld [vmem:[#allocation2] sm:$0xff]
    %v718 = vld [vmem:[#allocation2 + $0x8] sm:$0xff]
    %v719 = vld [vmem:[%s4] sm:$0xff]
    %v720 = vld [vmem:[%s4 + $0x8] sm:$0xff]
    %v721 = vld [vmem:[%s4 + $0x10] sm:$0xff]
    %v722 = vld [vmem:[%s4 + $0x18] sm:$0xff]
    %v723 = vld [vmem:[#allocation7] sm:$0x1]
    %v725 = vperm.slane %v723, 0
    %v728 = vsel %vm133, %v717, 0
    %v731 = vsel %vm133, %v718, 0
    %733 = vmatpush.msra.mxu0 0.0
    %734 = vmatpush.msra.mxu0 0.0
    %735 = vmatpush.msra.mxu0 0.0
    %736 = vmatpush.msra.mxu0 0.0
    %737 = vmatpush.msra.mxu0 0.0
    %738 = vmatpush.msra.mxu0 0.0
    %739 = vmatpush.msra.mxu0 0.0
    %740 = vmatpush.msra.mxu0 0.0
    %741 = vmatpush.msra.mxu0 0.0
    %742 = vmatpush.msra.mxu0 0.0
    %743 = vmatpush.msra.mxu0 0.0
    %744 = vmatpush.msra.mxu0 0.0
    %745 = vmatpush.msra.mxu0 %v722
    %746 = vmatpush.msra.mxu0 %v721
    %747 = vmatpush.msra.mxu0 %v720
    %748 = vmatpush.msra.mxu0 %v719
    %749 = vmatmul.f32.gmra.mxu0 %v728
    %v750 = vpop.f32.mrf.mxu0
    %v751 = vadd.f32 %v725, %v750
    %752 = vmatmul.f32.gmra.mxu0 %v731
    %v753 = vpop.f32.mrf.mxu0
    %v754 = vadd.f32 %v725, %v753
    %755 = vdwg.mxu0
    %v756 = vadd.f32 %v115, %v751
    %v757 = vadd.f32 %v116, %v754
    %s758 = sld [smem:[#allocation12]]
    %v759 = vmul.f32 %v756, %v756
    %v760 = vmul.f32 %v757, %v757
    %v761 = vsel %vm133, %v759, 0.0
    %762 = vadd.xlane.f32.xlu0 %v761
    %v763 = vpop.xlane.xlu0 %762
    %v764 = vsel %vm133, %v760, 0.0
    %765 = vadd.xlane.f32.xlu0 %v764
    %v766 = vpop.xlane.xlu0 %765
    %v767 = vmax.f32 %v763, 1e-10
    %v768 = vmax.f32 %v766, 1e-10
    %v769 = vrsqrt.pop %v767
    %v770 = vmul.f32 %v769, %v767
    %v771 = vmul.f32 %v770, %v769
    %v772 = vmul.f32 0.5, %v771
    %v773 = vsub.f32 1.5, %v772
    %v774 = vmul.f32 %v769, %v773
    %vm775 = vweird.f32 %v767
    %vm776 = vweird.f32 %v769
    %vm777 = vmor %vm775, %vm776
    %v778 = vsel %vm777, %v769, %v774
    %v779 = vrsqrt.pop %v768
    %v780 = vmul.f32 %v779, %v768
    %v781 = vmul.f32 %v780, %v779
    %v782 = vmul.f32 0.5, %v781
    %v783 = vsub.f32 1.5, %v782
    %v784 = vmul.f32 %v779, %v783
    %vm785 = vweird.f32 %v768
    %vm786 = vweird.f32 %v779
    %vm787 = vmor %vm785, %vm786
    %v788 = vsel %vm787, %v779, %v784
    %v789 = vstv %s758
    %v790 = vmul.f32 %v789, %v778
    %v791 = vmul.f32 %v789, %v788
    %v792 = vmul.f32 %v756, %v790
    %v793 = vmul.f32 %v757, %v791
    %v794 = vld [vmem:[%s6] sm:$0xff]
    %v795 = vld [vmem:[%s6 + $0x8] sm:$0xff]
    %v796 = vld [vmem:[%s6 + $0x10] sm:$0xff]
    %v797 = vld [vmem:[%s6 + $0x18] sm:$0xff]
    %v798 = vld [vmem:[#allocation9] sm:$0x1]
    %v800 = vperm.slane %v798, 0
    %v803 = vsel %vm133, %v792, 0
    %v806 = vsel %vm133, %v793, 0
    %808 = vmatpush.msra.mxu0 0.0
    %809 = vmatpush.msra.mxu0 0.0
    %810 = vmatpush.msra.mxu0 0.0
    %811 = vmatpush.msra.mxu0 0.0
    %812 = vmatpush.msra.mxu0 0.0
    %813 = vmatpush.msra.mxu0 0.0
    %814 = vmatpush.msra.mxu0 0.0
    %815 = vmatpush.msra.mxu0 0.0
    %816 = vmatpush.msra.mxu0 0.0
    %817 = vmatpush.msra.mxu0 0.0
    %818 = vmatpush.msra.mxu0 0.0
    %819 = vmatpush.msra.mxu0 0.0
    %820 = vmatpush.msra.mxu0 %v797
    %821 = vmatpush.msra.mxu0 %v796
    %822 = vmatpush.msra.mxu0 %v795
    %823 = vmatpush.msra.mxu0 %v794
    %824 = vmatmul.f32.gmra.mxu0 %v803
    %v825 = vpop.f32.mrf.mxu0
    %v826 = vadd.f32 %v800, %v825
    %827 = vmatmul.f32.gmra.mxu0 %v806
    %v828 = vpop.f32.mrf.mxu0
    %v829 = vadd.f32 %v800, %v828
    %830 = vdwg.mxu0
    %v831 = vmax.f32 %v826, 0.0
    %v832 = vmax.f32 %v829, 0.0
    %v833 = vld [vmem:[%s8] sm:$0xff]
    %v834 = vld [vmem:[%s8 + $0x8] sm:$0xff]
    %v835 = vld [vmem:[%s8 + $0x10] sm:$0xff]
    %v836 = vld [vmem:[%s8 + $0x18] sm:$0xff]
    %v837 = vld [vmem:[%s8 + $0x20] sm:$0xff]
    %v838 = vld [vmem:[%s8 + $0x28] sm:$0xff]
    %v839 = vld [vmem:[%s8 + $0x30] sm:$0xff]
    %v840 = vld [vmem:[%s8 + $0x38] sm:$0xff]
    %v841 = vld [vmem:[#allocation10] sm:$0x1]
    %v843 = vperm.slane %v841, 0
    %vm845 = vcmask 523264
    %v847 = vsel %vm845, %v831, 0
    %v850 = vsel %vm845, %v832, 0
    %852 = vmatpush.msra.mxu0 0.0
    %853 = vmatpush.msra.mxu0 0.0
    %854 = vmatpush.msra.mxu0 0.0
    %855 = vmatpush.msra.mxu0 0.0
    %856 = vmatpush.msra.mxu0 0.0
    %857 = vmatpush.msra.mxu0 0.0
    %858 = vmatpush.msra.mxu0 0.0
    %859 = vmatpush.msra.mxu0 0.0
    %860 = vmatpush.msra.mxu0 %v840
    %861 = vmatpush.msra.mxu0 %v839
    %862 = vmatpush.msra.mxu0 %v838
    %863 = vmatpush.msra.mxu0 %v837
    %864 = vmatpush.msra.mxu0 %v836
    %865 = vmatpush.msra.mxu0 %v835
    %866 = vmatpush.msra.mxu0 %v834
    %867 = vmatpush.msra.mxu0 %v833
    %868 = vmatmul.f32.gmra.mxu0 %v847
    %v869 = vpop.f32.mrf.mxu0
    %v870 = vadd.f32 %v843, %v869
    %871 = vmatmul.f32.gmra.mxu0 %v850
    %v872 = vpop.f32.mrf.mxu0
    %v873 = vadd.f32 %v843, %v872
    %874 = vdwg.mxu0
    %v875 = vadd.f32 %v792, %v870
    %v876 = vadd.f32 %v793, %v873
    %s877 = sld [smem:[#allocation12 + $0x1]]
    %v878 = vmul.f32 %v875, %v875
    %v879 = vmul.f32 %v876, %v876
    %v880 = vsel %vm133, %v878, 0.0
    %881 = vadd.xlane.f32.xlu0 %v880
    %v882 = vpop.xlane.xlu0 %881
    %v883 = vsel %vm133, %v879, 0.0
    %884 = vadd.xlane.f32.xlu0 %v883
    %v885 = vpop.xlane.xlu0 %884
    %v886 = vmax.f32 %v882, 1e-10
    %v887 = vmax.f32 %v885, 1e-10
    %v888 = vrsqrt.pop %v886
    %v889 = vmul.f32 %v888, %v886
    %v890 = vmul.f32 %v889, %v888
    %v891 = vmul.f32 0.5, %v890
    %v892 = vsub.f32 1.5, %v891
    %v893 = vmul.f32 %v888, %v892
    %vm894 = vweird.f32 %v886
    %vm895 = vweird.f32 %v888
    %vm896 = vmor %vm894, %vm895
    %v897 = vsel %vm896, %v888, %v893
    %v898 = vrsqrt.pop %v887
    %v899 = vmul.f32 %v898, %v887
    %v900 = vmul.f32 %v899, %v898
    %v901 = vmul.f32 0.5, %v900
    %v902 = vsub.f32 1.5, %v901
    %v903 = vmul.f32 %v898, %v902
    %vm904 = vweird.f32 %v887
    %vm905 = vweird.f32 %v898
    %vm906 = vmor %vm904, %vm905
    %v907 = vsel %vm906, %v898, %v903
    %v908 = vstv %s877
    %v909 = vmul.f32 %v908, %v897
    %v910 = vmul.f32 %v908, %v907
    %v911 = vmul.f32 %v875, %v909
    %v912 = vmul.f32 %v876, %v910
    %s913 = scalar_lea.vmem %s2, 32
    %v914 = vld [vmem:[%s913] sm:$0xff]
    %v915 = vld [vmem:[%s913 + $0x8] sm:$0xff]
    %v916 = vld [vmem:[%s913 + $0x10] sm:$0xff]
    %v917 = vld [vmem:[%s913 + $0x18] sm:$0xff]
    %s918 = scalar_lea.vmem %s3, 1
    %v919 = vld [vmem:[%s918] sm:$0x1]
    %v921 = vperm.slane %v919, 0
    %v924 = vsel %vm133, %v911, 0
    %v927 = vsel %vm133, %v912, 0
    %929 = vmatpush.msra.mxu0 0.0
    %930 = vmatpush.msra.mxu0 0.0
    %931 = vmatpush.msra.mxu0 0.0
    %932 = vmatpush.msra.mxu0 0.0
    %933 = vmatpush.msra.mxu0 0.0
    %934 = vmatpush.msra.mxu0 0.0
    %935 = vmatpush.msra.mxu0 0.0
    %936 = vmatpush.msra.mxu0 0.0
    %937 = vmatpush.msra.mxu0 0.0
    %938 = vmatpush.msra.mxu0 0.0
    %939 = vmatpush.msra.mxu0 0.0
    %940 = vmatpush.msra.mxu0 0.0
    %941 = vmatpush.msra.mxu0 %v917
    %942 = vmatpush.msra.mxu0 %v916
    %943 = vmatpush.msra.mxu0 %v915
    %944 = vmatpush.msra.mxu0 %v914
    %945 = vmatmul.f32.gmra.mxu0 %v924
    %v946 = vpop.f32.mrf.mxu0
    %v947 = vadd.f32 %v921, %v946
    %948 = vmatmul.f32.gmra.mxu0 %v927
    %v949 = vpop.f32.mrf.mxu0
    %v950 = vadd.f32 %v921, %v949
    %951 = vdwg.mxu0
    %953 = vrot.lane.b32.xlu0 %v947, 96
    %v954 = vpop.permute.xlu0 %953
    %v955 = vsel %vm166, %v947, 0
    %v957 = vsel %vm166, %v954, 0
    %959 = vmatpush.xpose.msra.mxu0 0.0
    %960 = vmatpush.xpose.msra.mxu0 0.0
    %961 = vmatpush.xpose.msra.mxu0 0.0
    %962 = vmatpush.xpose.msra.mxu0 0.0
    %963 = vmatpush.xpose.msra.mxu0 0.0
    %964 = vmatpush.xpose.msra.mxu0 0.0
    %965 = vmatpush.xpose.msra.mxu0 0.0
    %966 = vmatpush.xpose.msra.mxu0 0.0
    %967 = vmatpush.xpose.msra.mxu0 0.0
    %968 = vmatpush.xpose.msra.mxu0 0.0
    %969 = vmatpush.xpose.msra.mxu0 0.0
    %970 = vmatpush.xpose.msra.mxu0 0.0
    %971 = vmatpush.xpose.msra.mxu0 0.0
    %972 = vmatpush.xpose.msra.mxu0 0.0
    %973 = vmatpush.xpose.msra.mxu0 0.0
    %974 = vmatpush.xpose.msra.mxu0 %v957
    %975 = vmatmul.f32.gmra.mxu0 %v955
    %v976 = vpop.f32.mrf.mxu0
    %v977 = vadd.f32 %v121, %v976
    %978 = vdwg.mxu0
    %980 = vrot.lane.b32.xlu0 %v950, 96
    %v981 = vpop.permute.xlu0 %980
    %v982 = vsel %vm166, %v950, 0
    %v984 = vsel %vm166, %v981, 0
    %986 = vmatpush.xpose.msra.mxu0 0.0
    %987 = vmatpush.xpose.msra.mxu0 0.0
    %988 = vmatpush.xpose.msra.mxu0 0.0
    %989 = vmatpush.xpose.msra.mxu0 0.0
    %990 = vmatpush.xpose.msra.mxu0 0.0
    %991 = vmatpush.xpose.msra.mxu0 0.0
    %992 = vmatpush.xpose.msra.mxu0 0.0
    %993 = vmatpush.xpose.msra.mxu0 0.0
    %994 = vmatpush.xpose.msra.mxu0 0.0
    %995 = vmatpush.xpose.msra.mxu0 0.0
    %996 = vmatpush.xpose.msra.mxu0 0.0
    %997 = vmatpush.xpose.msra.mxu0 0.0
    %998 = vmatpush.xpose.msra.mxu0 0.0
    %999 = vmatpush.xpose.msra.mxu0 0.0
    %1000 = vmatpush.xpose.msra.mxu0 0.0
    %1001 = vmatpush.xpose.msra.mxu0 %v984
    %1002 = vmatmul.f32.gmra.mxu0 %v982
    %v1003 = vpop.f32.mrf.mxu0
    %v1004 = vadd.f32 %v122, %v1003
    %1005 = vdwg.mxu0
    %v1006 = vsel %vm166, %v977, -inf
    %1007 = vmax.xlane.f32.xlu0 %v1006
    %v1008 = vpop.xlane.xlu0 %1007
    %v1009 = vsel %vm166, %v1004, -inf
    %1010 = vmax.xlane.f32.xlu0 %v1009
    %v1011 = vpop.xlane.xlu0 %1010
    %v1012 = vsub.f32 %v977, %v1008
    %v1013 = vsub.f32 %v1004, %v1011
    %v1014 = vmul.f32 %v1012, 1.442695
    %v1015 = vpow.pop %v1014
    %v1016 = vmul.f32 %v1013, 1.442695
    %v1017 = vpow.pop %v1016
    %v1018 = vsel %vm166, %v1015, 0.0
    %1019 = vadd.xlane.f32.xlu0 %v1018
    %v1020 = vpop.xlane.xlu0 %1019
    %v1021 = vsel %vm166, %v1017, 0.0
    %1022 = vadd.xlane.f32.xlu0 %v1021
    %v1023 = vpop.xlane.xlu0 %1022
    %v1024 = vrcp.pop %v1020
    %v1025 = vrcp.pop %v1023
    %v1026 = vmul.f32 %v1015, %v1024
    %v1027 = vmul.f32 %v1017, %v1025
    %1028 = vrot.lane.b32.xlu0 %v947, 64
    %v1029 = vpop.permute.xlu0 %1028
    %v1032 = vsel %vm166, %v1026, 0
    %1034 = vmatpush.msra.mxu0 0.0
    %1035 = vmatpush.msra.mxu0 0.0
    %1036 = vmatpush.msra.mxu0 0.0
    %1037 = vmatpush.msra.mxu0 0.0
    %1038 = vmatpush.msra.mxu0 0.0
    %1039 = vmatpush.msra.mxu0 0.0
    %1040 = vmatpush.msra.mxu0 0.0
    %1041 = vmatpush.msra.mxu0 0.0
    %1042 = vmatpush.msra.mxu0 0.0
    %1043 = vmatpush.msra.mxu0 0.0
    %1044 = vmatpush.msra.mxu0 0.0
    %1045 = vmatpush.msra.mxu0 0.0
    %1046 = vmatpush.msra.mxu0 0.0
    %1047 = vmatpush.msra.mxu0 0.0
    %1048 = vmatpush.msra.mxu0 0.0
    %1049 = vmatpush.msra.mxu0 %v1029
    %1050 = vmatmul.f32.gmra.mxu0 %v1032
    %v1051 = vpop.f32.mrf.mxu0
    %v1052 = vadd.f32 0.0, %v1051
    %1053 = vdwg.mxu0
    %1054 = vrot.lane.b32.xlu0 %v950, 64
    %v1055 = vpop.permute.xlu0 %1054
    %v1058 = vsel %vm166, %v1027, 0
    %1060 = vmatpush.msra.mxu0 0.0
    %1061 = vmatpush.msra.mxu0 0.0
    %1062 = vmatpush.msra.mxu0 0.0
    %1063 = vmatpush.msra.mxu0 0.0
    %1064 = vmatpush.msra.mxu0 0.0
    %1065 = vmatpush.msra.mxu0 0.0
    %1066 = vmatpush.msra.mxu0 0.0
    %1067 = vmatpush.msra.mxu0 0.0
    %1068 = vmatpush.msra.mxu0 0.0
    %1069 = vmatpush.msra.mxu0 0.0
    %1070 = vmatpush.msra.mxu0 0.0
    %1071 = vmatpush.msra.mxu0 0.0
    %1072 = vmatpush.msra.mxu0 0.0
    %1073 = vmatpush.msra.mxu0 0.0
    %1074 = vmatpush.msra.mxu0 0.0
    %1075 = vmatpush.msra.mxu0 %v1055
    %1076 = vmatmul.f32.gmra.mxu0 %v1058
    %v1077 = vpop.f32.mrf.mxu0
    %v1078 = vadd.f32 0.0, %v1077
    %1079 = vdwg.mxu0
    %1080 = vst.msk [vmem:[#allocation2] sm:$0xff] %vm166, %v1052
    %1081 = vst.msk [vmem:[#allocation2 + $0x8] sm:$0xff] %vm166, %v1078
    %1082 = vrot.lane.b32.xlu0 %v947, 120
    %v1083 = vpop.permute.xlu0 %1082
    %1084 = vrot.lane.b32.xlu0 %v947, 88
    %v1085 = vpop.permute.xlu0 %1084
    %v1086 = vsel %vm166, %v1083, 0
    %v1088 = vsel %vm166, %v1085, 0
    %1090 = vmatpush.xpose.msra.mxu0 0.0
    %1091 = vmatpush.xpose.msra.mxu0 0.0
    %1092 = vmatpush.xpose.msra.mxu0 0.0
    %1093 = vmatpush.xpose.msra.mxu0 0.0
    %1094 = vmatpush.xpose.msra.mxu0 0.0
    %1095 = vmatpush.xpose.msra.mxu0 0.0
    %1096 = vmatpush.xpose.msra.mxu0 0.0
    %1097 = vmatpush.xpose.msra.mxu0 0.0
    %1098 = vmatpush.xpose.msra.mxu0 0.0
    %1099 = vmatpush.xpose.msra.mxu0 0.0
    %1100 = vmatpush.xpose.msra.mxu0 0.0
    %1101 = vmatpush.xpose.msra.mxu0 0.0
    %1102 = vmatpush.xpose.msra.mxu0 0.0
    %1103 = vmatpush.xpose.msra.mxu0 0.0
    %1104 = vmatpush.xpose.msra.mxu0 0.0
    %1105 = vmatpush.xpose.msra.mxu0 %v1088
    %1106 = vmatmul.f32.gmra.mxu0 %v1086
    %v1107 = vpop.f32.mrf.mxu0
    %v1108 = vadd.f32 %v121, %v1107
    %1109 = vdwg.mxu0
    %1110 = vrot.lane.b32.xlu0 %v950, 120
    %v1111 = vpop.permute.xlu0 %1110
    %1112 = vrot.lane.b32.xlu0 %v950, 88
    %v1113 = vpop.permute.xlu0 %1112
    %v1114 = vsel %vm166, %v1111, 0
    %v1116 = vsel %vm166, %v1113, 0
    %1118 = vmatpush.xpose.msra.mxu0 0.0
    %1119 = vmatpush.xpose.msra.mxu0 0.0
    %1120 = vmatpush.xpose.msra.mxu0 0.0
    %1121 = vmatpush.xpose.msra.mxu0 0.0
    %1122 = vmatpush.xpose.msra.mxu0 0.0
    %1123 = vmatpush.xpose.msra.mxu0 0.0
    %1124 = vmatpush.xpose.msra.mxu0 0.0
    %1125 = vmatpush.xpose.msra.mxu0 0.0
    %1126 = vmatpush.xpose.msra.mxu0 0.0
    %1127 = vmatpush.xpose.msra.mxu0 0.0
    %1128 = vmatpush.xpose.msra.mxu0 0.0
    %1129 = vmatpush.xpose.msra.mxu0 0.0
    %1130 = vmatpush.xpose.msra.mxu0 0.0
    %1131 = vmatpush.xpose.msra.mxu0 0.0
    %1132 = vmatpush.xpose.msra.mxu0 0.0
    %1133 = vmatpush.xpose.msra.mxu0 %v1116
    %1134 = vmatmul.f32.gmra.mxu0 %v1114
    %v1135 = vpop.f32.mrf.mxu0
    %v1136 = vadd.f32 %v122, %v1135
    %1137 = vdwg.mxu0
    %v1138 = vsel %vm166, %v1108, -inf
    %1139 = vmax.xlane.f32.xlu0 %v1138
    %v1140 = vpop.xlane.xlu0 %1139
    %v1141 = vsel %vm166, %v1136, -inf
    %1142 = vmax.xlane.f32.xlu0 %v1141
    %v1143 = vpop.xlane.xlu0 %1142
    %v1144 = vsub.f32 %v1108, %v1140
    %v1145 = vsub.f32 %v1136, %v1143
    %v1146 = vmul.f32 %v1144, 1.442695
    %v1147 = vpow.pop %v1146
    %v1148 = vmul.f32 %v1145, 1.442695
    %v1149 = vpow.pop %v1148
    %v1150 = vsel %vm166, %v1147, 0.0
    %1151 = vadd.xlane.f32.xlu0 %v1150
    %v1152 = vpop.xlane.xlu0 %1151
    %v1153 = vsel %vm166, %v1149, 0.0
    %1154 = vadd.xlane.f32.xlu0 %v1153
    %v1155 = vpop.xlane.xlu0 %1154
    %v1156 = vrcp.pop %v1152
    %v1157 = vrcp.pop %v1155
    %v1158 = vmul.f32 %v1147, %v1156
    %v1159 = vmul.f32 %v1149, %v1157
    %1160 = vrot.lane.b32.xlu0 %v947, 56
    %v1161 = vpop.permute.xlu0 %1160
    %v1164 = vsel %vm166, %v1158, 0
    %1166 = vmatpush.msra.mxu0 0.0
    %1167 = vmatpush.msra.mxu0 0.0
    %1168 = vmatpush.msra.mxu0 0.0
    %1169 = vmatpush.msra.mxu0 0.0
    %1170 = vmatpush.msra.mxu0 0.0
    %1171 = vmatpush.msra.mxu0 0.0
    %1172 = vmatpush.msra.mxu0 0.0
    %1173 = vmatpush.msra.mxu0 0.0
    %1174 = vmatpush.msra.mxu0 0.0
    %1175 = vmatpush.msra.mxu0 0.0
    %1176 = vmatpush.msra.mxu0 0.0
    %1177 = vmatpush.msra.mxu0 0.0
    %1178 = vmatpush.msra.mxu0 0.0
    %1179 = vmatpush.msra.mxu0 0.0
    %1180 = vmatpush.msra.mxu0 0.0
    %1181 = vmatpush.msra.mxu0 %v1161
    %1182 = vmatmul.f32.gmra.mxu0 %v1164
    %v1183 = vpop.f32.mrf.mxu0
    %v1184 = vadd.f32 0.0, %v1183
    %1185 = vdwg.mxu0
    %1186 = vrot.lane.b32.xlu0 %v950, 56
    %v1187 = vpop.permute.xlu0 %1186
    %v1190 = vsel %vm166, %v1159, 0
    %1192 = vmatpush.msra.mxu0 0.0
    %1193 = vmatpush.msra.mxu0 0.0
    %1194 = vmatpush.msra.mxu0 0.0
    %1195 = vmatpush.msra.mxu0 0.0
    %1196 = vmatpush.msra.mxu0 0.0
    %1197 = vmatpush.msra.mxu0 0.0
    %1198 = vmatpush.msra.mxu0 0.0
    %1199 = vmatpush.msra.mxu0 0.0
    %1200 = vmatpush.msra.mxu0 0.0
    %1201 = vmatpush.msra.mxu0 0.0
    %1202 = vmatpush.msra.mxu0 0.0
    %1203 = vmatpush.msra.mxu0 0.0
    %1204 = vmatpush.msra.mxu0 0.0
    %1205 = vmatpush.msra.mxu0 0.0
    %1206 = vmatpush.msra.mxu0 0.0
    %1207 = vmatpush.msra.mxu0 %v1187
    %1208 = vmatmul.f32.gmra.mxu0 %v1190
    %v1209 = vpop.f32.mrf.mxu0
    %v1210 = vadd.f32 0.0, %v1209
    %1211 = vdwg.mxu0
    %1214 = vrot.lane.b32.xlu0 %v1184, 8
    %v1215 = vpop.permute.xlu0 %1214
    %1216 = vrot.lane.b32.xlu0 %v1210, 8
    %v1217 = vpop.permute.xlu0 %1216
    %1220 = vst.msk [vmem:[#allocation2] sm:$0xff] %vm432, %v1215
    %1221 = vst.msk [vmem:[#allocation2 + $0x8] sm:$0xff] %vm432, %v1217
    %1222 = vrot.lane.b32.xlu0 %v947, 112
    %v1223 = vpop.permute.xlu0 %1222
    %1224 = vrot.lane.b32.xlu0 %v947, 80
    %v1225 = vpop.permute.xlu0 %1224
    %v1226 = vsel %vm166, %v1223, 0
    %v1228 = vsel %vm166, %v1225, 0
    %1230 = vmatpush.xpose.msra.mxu0 0.0
    %1231 = vmatpush.xpose.msra.mxu0 0.0
    %1232 = vmatpush.xpose.msra.mxu0 0.0
    %1233 = vmatpush.xpose.msra.mxu0 0.0
    %1234 = vmatpush.xpose.msra.mxu0 0.0
    %1235 = vmatpush.xpose.msra.mxu0 0.0
    %1236 = vmatpush.xpose.msra.mxu0 0.0
    %1237 = vmatpush.xpose.msra.mxu0 0.0
    %1238 = vmatpush.xpose.msra.mxu0 0.0
    %1239 = vmatpush.xpose.msra.mxu0 0.0
    %1240 = vmatpush.xpose.msra.mxu0 0.0
    %1241 = vmatpush.xpose.msra.mxu0 0.0
    %1242 = vmatpush.xpose.msra.mxu0 0.0
    %1243 = vmatpush.xpose.msra.mxu0 0.0
    %1244 = vmatpush.xpose.msra.mxu0 0.0
    %1245 = vmatpush.xpose.msra.mxu0 %v1228
    %1246 = vmatmul.f32.gmra.mxu0 %v1226
    %v1247 = vpop.f32.mrf.mxu0
    %v1248 = vadd.f32 %v121, %v1247
    %1249 = vdwg.mxu0
    %1250 = vrot.lane.b32.xlu0 %v950, 112
    %v1251 = vpop.permute.xlu0 %1250
    %1252 = vrot.lane.b32.xlu0 %v950, 80
    %v1253 = vpop.permute.xlu0 %1252
    %v1254 = vsel %vm166, %v1251, 0
    %v1256 = vsel %vm166, %v1253, 0
    %1258 = vmatpush.xpose.msra.mxu0 0.0
    %1259 = vmatpush.xpose.msra.mxu0 0.0
    %1260 = vmatpush.xpose.msra.mxu0 0.0
    %1261 = vmatpush.xpose.msra.mxu0 0.0
    %1262 = vmatpush.xpose.msra.mxu0 0.0
    %1263 = vmatpush.xpose.msra.mxu0 0.0
    %1264 = vmatpush.xpose.msra.mxu0 0.0
    %1265 = vmatpush.xpose.msra.mxu0 0.0
    %1266 = vmatpush.xpose.msra.mxu0 0.0
    %1267 = vmatpush.xpose.msra.mxu0 0.0
    %1268 = vmatpush.xpose.msra.mxu0 0.0
    %1269 = vmatpush.xpose.msra.mxu0 0.0
    %1270 = vmatpush.xpose.msra.mxu0 0.0
    %1271 = vmatpush.xpose.msra.mxu0 0.0
    %1272 = vmatpush.xpose.msra.mxu0 0.0
    %1273 = vmatpush.xpose.msra.mxu0 %v1256
    %1274 = vmatmul.f32.gmra.mxu0 %v1254
    %v1275 = vpop.f32.mrf.mxu0
    %v1276 = vadd.f32 %v122, %v1275
    %1277 = vdwg.mxu0
    %v1278 = vsel %vm166, %v1248, -inf
    %1279 = vmax.xlane.f32.xlu0 %v1278
    %v1280 = vpop.xlane.xlu0 %1279
    %v1281 = vsel %vm166, %v1276, -inf
    %1282 = vmax.xlane.f32.xlu0 %v1281
    %v1283 = vpop.xlane.xlu0 %1282
    %v1284 = vsub.f32 %v1248, %v1280
    %v1285 = vsub.f32 %v1276, %v1283
    %v1286 = vmul.f32 %v1284, 1.442695
    %v1287 = vpow.pop %v1286
    %v1288 = vmul.f32 %v1285, 1.442695
    %v1289 = vpow.pop %v1288
    %v1290 = vsel %vm166, %v1287, 0.0
    %1291 = vadd.xlane.f32.xlu0 %v1290
    %v1292 = vpop.xlane.xlu0 %1291
    %v1293 = vsel %vm166, %v1289, 0.0
    %1294 = vadd.xlane.f32.xlu0 %v1293
    %v1295 = vpop.xlane.xlu0 %1294
    %v1296 = vrcp.pop %v1292
    %v1297 = vrcp.pop %v1295
    %v1298 = vmul.f32 %v1287, %v1296
    %v1299 = vmul.f32 %v1289, %v1297
    %1300 = vrot.lane.b32.xlu0 %v947, 48
    %v1301 = vpop.permute.xlu0 %1300
    %v1304 = vsel %vm166, %v1298, 0
    %1306 = vmatpush.msra.mxu0 0.0
    %1307 = vmatpush.msra.mxu0 0.0
    %1308 = vmatpush.msra.mxu0 0.0
    %1309 = vmatpush.msra.mxu0 0.0
    %1310 = vmatpush.msra.mxu0 0.0
    %1311 = vmatpush.msra.mxu0 0.0
    %1312 = vmatpush.msra.mxu0 0.0
    %1313 = vmatpush.msra.mxu0 0.0
    %1314 = vmatpush.msra.mxu0 0.0
    %1315 = vmatpush.msra.mxu0 0.0
    %1316 = vmatpush.msra.mxu0 0.0
    %1317 = vmatpush.msra.mxu0 0.0
    %1318 = vmatpush.msra.mxu0 0.0
    %1319 = vmatpush.msra.mxu0 0.0
    %1320 = vmatpush.msra.mxu0 0.0
    %1321 = vmatpush.msra.mxu0 %v1301
    %1322 = vmatmul.f32.gmra.mxu0 %v1304
    %v1323 = vpop.f32.mrf.mxu0
    %v1324 = vadd.f32 0.0, %v1323
    %1325 = vdwg.mxu0
    %1326 = vrot.lane.b32.xlu0 %v950, 48
    %v1327 = vpop.permute.xlu0 %1326
    %v1330 = vsel %vm166, %v1299, 0
    %1332 = vmatpush.msra.mxu0 0.0
    %1333 = vmatpush.msra.mxu0 0.0
    %1334 = vmatpush.msra.mxu0 0.0
    %1335 = vmatpush.msra.mxu0 0.0
    %1336 = vmatpush.msra.mxu0 0.0
    %1337 = vmatpush.msra.mxu0 0.0
    %1338 = vmatpush.msra.mxu0 0.0
    %1339 = vmatpush.msra.mxu0 0.0
    %1340 = vmatpush.msra.mxu0 0.0
    %1341 = vmatpush.msra.mxu0 0.0
    %1342 = vmatpush.msra.mxu0 0.0
    %1343 = vmatpush.msra.mxu0 0.0
    %1344 = vmatpush.msra.mxu0 0.0
    %1345 = vmatpush.msra.mxu0 0.0
    %1346 = vmatpush.msra.mxu0 0.0
    %1347 = vmatpush.msra.mxu0 %v1327
    %1348 = vmatmul.f32.gmra.mxu0 %v1330
    %v1349 = vpop.f32.mrf.mxu0
    %v1350 = vadd.f32 0.0, %v1349
    %1351 = vdwg.mxu0
    %1354 = vrot.lane.b32.xlu0 %v1324, 16
    %v1355 = vpop.permute.xlu0 %1354
    %1356 = vrot.lane.b32.xlu0 %v1350, 16
    %v1357 = vpop.permute.xlu0 %1356
    %1360 = vst.msk [vmem:[#allocation2] sm:$0xff] %vm573, %v1355
    %1361 = vst.msk [vmem:[#allocation2 + $0x8] sm:$0xff] %vm573, %v1357
    %1362 = vrot.lane.b32.xlu0 %v947, 104
    %v1363 = vpop.permute.xlu0 %1362
    %1364 = vrot.lane.b32.xlu0 %v947, 72
    %v1365 = vpop.permute.xlu0 %1364
    %v1366 = vsel %vm166, %v1363, 0
    %v1368 = vsel %vm166, %v1365, 0
    %1370 = vmatpush.xpose.msra.mxu0 0.0
    %1371 = vmatpush.xpose.msra.mxu0 0.0
    %1372 = vmatpush.xpose.msra.mxu0 0.0
    %1373 = vmatpush.xpose.msra.mxu0 0.0
    %1374 = vmatpush.xpose.msra.mxu0 0.0
    %1375 = vmatpush.xpose.msra.mxu0 0.0
    %1376 = vmatpush.xpose.msra.mxu0 0.0
    %1377 = vmatpush.xpose.msra.mxu0 0.0
    %1378 = vmatpush.xpose.msra.mxu0 0.0
    %1379 = vmatpush.xpose.msra.mxu0 0.0
    %1380 = vmatpush.xpose.msra.mxu0 0.0
    %1381 = vmatpush.xpose.msra.mxu0 0.0
    %1382 = vmatpush.xpose.msra.mxu0 0.0
    %1383 = vmatpush.xpose.msra.mxu0 0.0
    %1384 = vmatpush.xpose.msra.mxu0 0.0
    %1385 = vmatpush.xpose.msra.mxu0 %v1368
    %1386 = vmatmul.f32.gmra.mxu0 %v1366
    %v1387 = vpop.f32.mrf.mxu0
    %v1388 = vadd.f32 %v121, %v1387
    %1389 = vdwg.mxu0
    %1390 = vrot.lane.b32.xlu0 %v950, 104
    %v1391 = vpop.permute.xlu0 %1390
    %1392 = vrot.lane.b32.xlu0 %v950, 72
    %v1393 = vpop.permute.xlu0 %1392
    %v1394 = vsel %vm166, %v1391, 0
    %v1396 = vsel %vm166, %v1393, 0
    %1398 = vmatpush.xpose.msra.mxu0 0.0
    %1399 = vmatpush.xpose.msra.mxu0 0.0
    %1400 = vmatpush.xpose.msra.mxu0 0.0
    %1401 = vmatpush.xpose.msra.mxu0 0.0
    %1402 = vmatpush.xpose.msra.mxu0 0.0
    %1403 = vmatpush.xpose.msra.mxu0 0.0
    %1404 = vmatpush.xpose.msra.mxu0 0.0
    %1405 = vmatpush.xpose.msra.mxu0 0.0
    %1406 = vmatpush.xpose.msra.mxu0 0.0
    %1407 = vmatpush.xpose.msra.mxu0 0.0
    %1408 = vmatpush.xpose.msra.mxu0 0.0
    %1409 = vmatpush.xpose.msra.mxu0 0.0
    %1410 = vmatpush.xpose.msra.mxu0 0.0
    %1411 = vmatpush.xpose.msra.mxu0 0.0
    %1412 = vmatpush.xpose.msra.mxu0 0.0
    %1413 = vmatpush.xpose.msra.mxu0 %v1396
    %1414 = vmatmul.f32.gmra.mxu0 %v1394
    %v1415 = vpop.f32.mrf.mxu0
    %v1416 = vadd.f32 %v122, %v1415
    %1417 = vdwg.mxu0
    %v1418 = vsel %vm166, %v1388, -inf
    %1419 = vmax.xlane.f32.xlu0 %v1418
    %v1420 = vpop.xlane.xlu0 %1419
    %v1421 = vsel %vm166, %v1416, -inf
    %1422 = vmax.xlane.f32.xlu0 %v1421
    %v1423 = vpop.xlane.xlu0 %1422
    %v1424 = vsub.f32 %v1388, %v1420
    %v1425 = vsub.f32 %v1416, %v1423
    %v1426 = vmul.f32 %v1424, 1.442695
    %v1427 = vpow.pop %v1426
    %v1428 = vmul.f32 %v1425, 1.442695
    %v1429 = vpow.pop %v1428
    %v1430 = vsel %vm166, %v1427, 0.0
    %1431 = vadd.xlane.f32.xlu0 %v1430
    %v1432 = vpop.xlane.xlu0 %1431
    %v1433 = vsel %vm166, %v1429, 0.0
    %1434 = vadd.xlane.f32.xlu0 %v1433
    %v1435 = vpop.xlane.xlu0 %1434
    %v1436 = vrcp.pop %v1432
    %v1437 = vrcp.pop %v1435
    %v1438 = vmul.f32 %v1427, %v1436
    %v1439 = vmul.f32 %v1429, %v1437
    %1440 = vrot.lane.b32.xlu0 %v947, 40
    %v1441 = vpop.permute.xlu0 %1440
    %v1444 = vsel %vm166, %v1438, 0
    %1446 = vmatpush.msra.mxu0 0.0
    %1447 = vmatpush.msra.mxu0 0.0
    %1448 = vmatpush.msra.mxu0 0.0
    %1449 = vmatpush.msra.mxu0 0.0
    %1450 = vmatpush.msra.mxu0 0.0
    %1451 = vmatpush.msra.mxu0 0.0
    %1452 = vmatpush.msra.mxu0 0.0
    %1453 = vmatpush.msra.mxu0 0.0
    %1454 = vmatpush.msra.mxu0 0.0
    %1455 = vmatpush.msra.mxu0 0.0
    %1456 = vmatpush.msra.mxu0 0.0
    %1457 = vmatpush.msra.mxu0 0.0
    %1458 = vmatpush.msra.mxu0 0.0
    %1459 = vmatpush.msra.mxu0 0.0
    %1460 = vmatpush.msra.mxu0 0.0
    %1461 = vmatpush.msra.mxu0 %v1441
    %1462 = vmatmul.f32.gmra.mxu0 %v1444
    %v1463 = vpop.f32.mrf.mxu0
    %v1464 = vadd.f32 0.0, %v1463
    %1465 = vdwg.mxu0
    %1466 = vrot.lane.b32.xlu0 %v950, 40
    %v1467 = vpop.permute.xlu0 %1466
    %v1470 = vsel %vm166, %v1439, 0
    %1472 = vmatpush.msra.mxu0 0.0
    %1473 = vmatpush.msra.mxu0 0.0
    %1474 = vmatpush.msra.mxu0 0.0
    %1475 = vmatpush.msra.mxu0 0.0
    %1476 = vmatpush.msra.mxu0 0.0
    %1477 = vmatpush.msra.mxu0 0.0
    %1478 = vmatpush.msra.mxu0 0.0
    %1479 = vmatpush.msra.mxu0 0.0
    %1480 = vmatpush.msra.mxu0 0.0
    %1481 = vmatpush.msra.mxu0 0.0
    %1482 = vmatpush.msra.mxu0 0.0
    %1483 = vmatpush.msra.mxu0 0.0
    %1484 = vmatpush.msra.mxu0 0.0
    %1485 = vmatpush.msra.mxu0 0.0
    %1486 = vmatpush.msra.mxu0 0.0
    %1487 = vmatpush.msra.mxu0 %v1467
    %1488 = vmatmul.f32.gmra.mxu0 %v1470
    %v1489 = vpop.f32.mrf.mxu0
    %v1490 = vadd.f32 0.0, %v1489
    %1491 = vdwg.mxu0
    %1494 = vrot.lane.b32.xlu0 %v1464, 24
    %v1495 = vpop.permute.xlu0 %1494
    %1496 = vrot.lane.b32.xlu0 %v1490, 24
    %v1497 = vpop.permute.xlu0 %1496
    %1500 = vst.msk [vmem:[#allocation2] sm:$0xff] %vm714, %v1495
    %1501 = vst.msk [vmem:[#allocation2 + $0x8] sm:$0xff] %vm714, %v1497
    %v1502 = vld [vmem:[#allocation2] sm:$0xff]
    %v1503 = vld [vmem:[#allocation2 + $0x8] sm:$0xff]
    %s1504 = scalar_lea.vmem %s4, 32
    %v1505 = vld [vmem:[%s1504] sm:$0xff]
    %v1506 = vld [vmem:[%s1504 + $0x8] sm:$0xff]
    %v1507 = vld [vmem:[%s1504 + $0x10] sm:$0xff]
    %v1508 = vld [vmem:[%s1504 + $0x18] sm:$0xff]
    %s1509 = scalar_lea.vmem [#allocation7], 1
    %v1510 = vld [vmem:[%s1509] sm:$0x1]
    %v1512 = vperm.slane %v1510, 0
    %v1515 = vsel %vm133, %v1502, 0
    %v1518 = vsel %vm133, %v1503, 0
    %1520 = vmatpush.msra.mxu0 0.0
    %1521 = vmatpush.msra.mxu0 0.0
    %1522 = vmatpush.msra.mxu0 0.0
    %1523 = vmatpush.msra.mxu0 0.0
    %1524 = vmatpush.msra.mxu0 0.0
    %1525 = vmatpush.msra.mxu0 0.0
    %1526 = vmatpush.msra.mxu0 0.0
    %1527 = vmatpush.msra.mxu0 0.0
    %1528 = vmatpush.msra.mxu0 0.0
    %1529 = vmatpush.msra.mxu0 0.0
    %1530 = vmatpush.msra.mxu0 0.0
    %1531 = vmatpush.msra.mxu0 0.0
    %1532 = vmatpush.msra.mxu0 %v1508
    %1533 = vmatpush.msra.mxu0 %v1507
    %1534 = vmatpush.msra.mxu0 %v1506
    %1535 = vmatpush.msra.mxu0 %v1505
    %1536 = vmatmul.f32.gmra.mxu0 %v1515
    %v1537 = vpop.f32.mrf.mxu0
    %v1538 = vadd.f32 %v1512, %v1537
    %1539 = vmatmul.f32.gmra.mxu0 %v1518
    %v1540 = vpop.f32.mrf.mxu0
    %v1541 = vadd.f32 %v1512, %v1540
    %1542 = vdwg.mxu0
    %v1543 = vadd.f32 %v911, %v1538
    %v1544 = vadd.f32 %v912, %v1541
    %s1545 = sld [smem:[#allocation12 + $0x80]]
    %v1546 = vmul.f32 %v1543, %v1543
    %v1547 = vmul.f32 %v1544, %v1544
    %v1548 = vsel %vm133, %v1546, 0.0
    %1549 = vadd.xlane.f32.xlu0 %v1548
    %v1550 = vpop.xlane.xlu0 %1549
    %v1551 = vsel %vm133, %v1547, 0.0
    %1552 = vadd.xlane.f32.xlu0 %v1551
    %v1553 = vpop.xlane.xlu0 %1552
    %v1554 = vmax.f32 %v1550, 1e-10
    %v1555 = vmax.f32 %v1553, 1e-10
    %v1556 = vrsqrt.pop %v1554
    %v1557 = vmul.f32 %v1556, %v1554
    %v1558 = vmul.f32 %v1557, %v1556
    %v1559 = vmul.f32 0.5, %v1558
    %v1560 = vsub.f32 1.5, %v1559
    %v1561 = vmul.f32 %v1556, %v1560
    %vm1562 = vweird.f32 %v1554
    %vm1563 = vweird.f32 %v1556
    %vm1564 = vmor %vm1562, %vm1563
    %v1565 = vsel %vm1564, %v1556, %v1561
    %v1566 = vrsqrt.pop %v1555
    %v1567 = vmul.f32 %v1566, %v1555
    %v1568 = vmul.f32 %v1567, %v1566
    %v1569 = vmul.f32 0.5, %v1568
    %v1570 = vsub.f32 1.5, %v1569
    %v1571 = vmul.f32 %v1566, %v1570
    %vm1572 = vweird.f32 %v1555
    %vm1573 = vweird.f32 %v1566
    %vm1574 = vmor %vm1572, %vm1573
    %v1575 = vsel %vm1574, %v1566, %v1571
    %v1576 = vstv %s1545
    %v1577 = vmul.f32 %v1576, %v1565
    %v1578 = vmul.f32 %v1576, %v1575
    %v1579 = vmul.f32 %v1543, %v1577
    %v1580 = vmul.f32 %v1544, %v1578
    %s1581 = scalar_lea.vmem %s6, 32
    %v1582 = vld [vmem:[%s1581] sm:$0xff]
    %v1583 = vld [vmem:[%s1581 + $0x8] sm:$0xff]
    %v1584 = vld [vmem:[%s1581 + $0x10] sm:$0xff]
    %v1585 = vld [vmem:[%s1581 + $0x18] sm:$0xff]
    %s1586 = scalar_lea.vmem [#allocation9], 1
    %v1587 = vld [vmem:[%s1586] sm:$0x1]
    %v1589 = vperm.slane %v1587, 0
    %v1592 = vsel %vm133, %v1579, 0
    %v1595 = vsel %vm133, %v1580, 0
    %1597 = vmatpush.msra.mxu0 0.0
    %1598 = vmatpush.msra.mxu0 0.0
    %1599 = vmatpush.msra.mxu0 0.0
    %1600 = vmatpush.msra.mxu0 0.0
    %1601 = vmatpush.msra.mxu0 0.0
    %1602 = vmatpush.msra.mxu0 0.0
    %1603 = vmatpush.msra.mxu0 0.0
    %1604 = vmatpush.msra.mxu0 0.0
    %1605 = vmatpush.msra.mxu0 0.0
    %1606 = vmatpush.msra.mxu0 0.0
    %1607 = vmatpush.msra.mxu0 0.0
    %1608 = vmatpush.msra.mxu0 0.0
    %1609 = vmatpush.msra.mxu0 %v1585
    %1610 = vmatpush.msra.mxu0 %v1584
    %1611 = vmatpush.msra.mxu0 %v1583
    %1612 = vmatpush.msra.mxu0 %v1582
    %1613 = vmatmul.f32.gmra.mxu0 %v1592
    %v1614 = vpop.f32.mrf.mxu0
    %v1615 = vadd.f32 %v1589, %v1614
    %1616 = vmatmul.f32.gmra.mxu0 %v1595
    %v1617 = vpop.f32.mrf.mxu0
    %v1618 = vadd.f32 %v1589, %v1617
    %1619 = vdwg.mxu0
    %v1620 = vmax.f32 %v1615, 0.0
    %v1621 = vmax.f32 %v1618, 0.0
    %s1622 = scalar_lea.vmem %s8, 64
    %v1623 = vld [vmem:[%s1622] sm:$0xff]
    %v1624 = vld [vmem:[%s1622 + $0x8] sm:$0xff]
    %v1625 = vld [vmem:[%s1622 + $0x10] sm:$0xff]
    %v1626 = vld [vmem:[%s1622 + $0x18] sm:$0xff]
    %v1627 = vld [vmem:[%s1622 + $0x20] sm:$0xff]
    %v1628 = vld [vmem:[%s1622 + $0x28] sm:$0xff]
    %v1629 = vld [vmem:[%s1622 + $0x30] sm:$0xff]
    %v1630 = vld [vmem:[%s1622 + $0x38] sm:$0xff]
    %s1631 = scalar_lea.vmem [#allocation10], 1
    %v1632 = vld [vmem:[%s1631] sm:$0x1]
    %v1634 = vperm.slane %v1632, 0
    %v1637 = vsel %vm845, %v1620, 0
    %v1640 = vsel %vm845, %v1621, 0
    %1642 = vmatpush.msra.mxu0 0.0
    %1643 = vmatpush.msra.mxu0 0.0
    %1644 = vmatpush.msra.mxu0 0.0
    %1645 = vmatpush.msra.mxu0 0.0
    %1646 = vmatpush.msra.mxu0 0.0
    %1647 = vmatpush.msra.mxu0 0.0
    %1648 = vmatpush.msra.mxu0 0.0
    %1649 = vmatpush.msra.mxu0 0.0
    %1650 = vmatpush.msra.mxu0 %v1630
    %1651 = vmatpush.msra.mxu0 %v1629
    %1652 = vmatpush.msra.mxu0 %v1628
    %1653 = vmatpush.msra.mxu0 %v1627
    %1654 = vmatpush.msra.mxu0 %v1626
    %1655 = vmatpush.msra.mxu0 %v1625
    %1656 = vmatpush.msra.mxu0 %v1624
    %1657 = vmatpush.msra.mxu0 %v1623
    %1658 = vmatmul.f32.gmra.mxu0 %v1637
    %v1659 = vpop.f32.mrf.mxu0
    %v1660 = vadd.f32 %v1634, %v1659
    %1661 = vmatmul.f32.gmra.mxu0 %v1640
    %v1662 = vpop.f32.mrf.mxu0
    %v1663 = vadd.f32 %v1634, %v1662
    %1664 = vdwg.mxu0
    %v1665 = vadd.f32 %v1579, %v1660
    %v1666 = vadd.f32 %v1580, %v1663
    %s1667 = sld [smem:[#allocation12 + $0x81]]
    %v1668 = vmul.f32 %v1665, %v1665
    %v1669 = vmul.f32 %v1666, %v1666
    %v1670 = vsel %vm133, %v1668, 0.0
    %1671 = vadd.xlane.f32.xlu0 %v1670
    %v1672 = vpop.xlane.xlu0 %1671
    %v1673 = vsel %vm133, %v1669, 0.0
    %1674 = vadd.xlane.f32.xlu0 %v1673
    %v1675 = vpop.xlane.xlu0 %1674
    %v1676 = vmax.f32 %v1672, 1e-10
    %v1677 = vmax.f32 %v1675, 1e-10
    %v1678 = vrsqrt.pop %v1676
    %v1679 = vmul.f32 %v1678, %v1676
    %v1680 = vmul.f32 %v1679, %v1678
    %v1681 = vmul.f32 0.5, %v1680
    %v1682 = vsub.f32 1.5, %v1681
    %v1683 = vmul.f32 %v1678, %v1682
    %vm1684 = vweird.f32 %v1676
    %vm1685 = vweird.f32 %v1678
    %vm1686 = vmor %vm1684, %vm1685
    %v1687 = vsel %vm1686, %v1678, %v1683
    %v1688 = vrsqrt.pop %v1677
    %v1689 = vmul.f32 %v1688, %v1677
    %v1690 = vmul.f32 %v1689, %v1688
    %v1691 = vmul.f32 0.5, %v1690
    %v1692 = vsub.f32 1.5, %v1691
    %v1693 = vmul.f32 %v1688, %v1692
    %vm1694 = vweird.f32 %v1677
    %vm1695 = vweird.f32 %v1688
    %vm1696 = vmor %vm1694, %vm1695
    %v1697 = vsel %vm1696, %v1688, %v1693
    %v1698 = vstv %s1667
    %v1699 = vmul.f32 %v1698, %v1687
    %v1700 = vmul.f32 %v1698, %v1697
    %v1701 = vmul.f32 %v1665, %v1699
    %v1702 = vmul.f32 %v1666, %v1700
    %1703 = vst.msk [vmem:[#allocation13] sm:$0xff] %vm133, %v1701
    %1704 = vst.msk [vmem:[#allocation13 + $0x8] sm:$0xff] %vm133, %v1702
    // Predicated region
    $region66: #{encoder_forward.1} parent=1 // pred_check
      _
    $region67: #{encoder_forward.1} parent=1 // pred_check_branch
      %1706 = sbr.rel (0) target = $region69
    $region68: #{encoder_forward.1} parent=1 // pred_region
      %1708 = vsyncadd [#allocation5], 0
      %s1709 = sshll.u32 [#allocation13], 4
      %s1710 = int_to_ptr.vmem [resolvable:$true] %s1709
      %s1711 = sshll.u32 %s11, 4
      %s1712 = int_to_ptr.hbm [resolvable:$true] %s1711
      %1717 = dma.vmem_to_hbm [thread:$0]  %s1710, 256, %s1712, [#allocation5], 128, 128, 8
    $region69: #{encoder_forward.1} parent=1 // pred_fallthru
      _
    // Predicated region
    $region70: #{encoder_forward.1} parent=1 // pred_check
      _
    $region71: #{encoder_forward.1} parent=1 // pred_check_branch
      %1719 = sbr.rel (0) target = $region73
    $region72: #{encoder_forward.1} parent=1 // pred_region
      %1721 = dma.done [#allocation5], 256
    $region73: #{encoder_forward.1} parent=1 // pred_fallthru
      _
    %1722 = vsyncpa [#allocation4], 1
    %1723 = vsyncpa [#allocation8], 1
    %1724 = vsyncpa [#allocation11], 1
    %1725 = vsyncpa [#allocation5], 1
    %1726 = vsyncpa [#allocation6], 1

</llo_original>
